<compile_context>
chip_gen: v6e
topology: v6e:2x2x1
jax: 0.10.0
libtpu: 0.0.40
codegen_flags: <defaults>
</compile_context>

<pallas_src>
import math
import functools

import jax
import jax.numpy as jnp
from jax import lax
from jax.experimental import pallas as pl
from jax.experimental.pallas import tpu as pltpu

EPS = 1e-5          # LayerNorm eps used by the reference module
NEG_INF = -1e30     # large finite negative (safe even for low-precision paths)


def transformer_block_kernel(x_ref,
                             wqkv_ref, bqkv_ref,
                             wo_ref, bo_ref,
                             g1_ref, s1_ref, g2_ref, s2_ref,
                             w1_ref, b1_ref, w2_ref, b2_ref,
                             o_ref,
                             *, num_heads, batch, seq):
    B, T, NH = batch, seq, num_heads
    x = x_ref[...]                          # (B*T, D), float32
    BT, D = x.shape
    hd = D // NH
    mm_dtype = wqkv_ref.dtype               # matmul operand dtype (bf16 or f32)

    def layernorm(h, g, s):
        # one-pass mean / variance, rsqrt on the EUP (f32 throughout)
        mean = jnp.mean(h, axis=-1, keepdims=True)
        msq = jnp.mean(h * h, axis=-1, keepdims=True)
        var = msq - mean * mean
        return (h - mean) * lax.rsqrt(var + EPS) * g + s

    # ---------------- attention sub-block ----------------
    h1 = layernorm(x, g1_ref[...], s1_ref[...])

    # fused QKV projection: one (B*T, D) @ (D, 3D) MXU push, f32 accumulation
    qkv = jnp.dot(h1.astype(mm_dtype), wqkv_ref[...],
                  preferred_element_type=jnp.float32)
    qkv = (qkv + bqkv_ref[...]).astype(mm_dtype)
    qkv = qkv.reshape(B, T, 3 * D)          # free reshape (row dim split only)

    # gather heads onto a leading batch axis: (NH*B, T, hd)
    def split_heads(base):
        heads = [qkv[:, :, base + h * hd: base + (h + 1) * hd]
                 for h in range(NH)]
        return jnp.stack(heads, axis=0).reshape(NH * B, T, hd)

    qb = split_heads(0)
    kb = split_heads(D)
    vb = split_heads(2 * D)

    # single batched score contraction over all (head, batch) pairs
    scale = 1.0 / math.sqrt(hd)
    scores = jnp.einsum('bqd,bkd->bqk', qb, kb,
                        preferred_element_type=jnp.float32) * scale

    # causal mask, built once for the whole kernel
    row = lax.broadcasted_iota(jnp.int32, (T, T), 0)
    col = lax.broadcasted_iota(jnp.int32, (T, T), 1)
    scores = jnp.where(col > row, NEG_INF, scores)

    # softmax in f32; reciprocal goes to the EUP slot
    scores = scores - jnp.max(scores, axis=-1, keepdims=True)
    p = jnp.exp(scores)
    p = p * pl.reciprocal(jnp.sum(p, axis=-1, keepdims=True), approx=True)
    # attention dropout: drop_rate = 0.0 -> identity

    ctx = jnp.einsum('bqk,bkd->bqd', p.astype(mm_dtype), vb,
                     preferred_element_type=jnp.float32)     # (NH*B, T, hd)
    ctx = ctx.reshape(NH, B, T, hd)
    ctx = jnp.concatenate([ctx[h] for h in range(NH)], axis=-1)  # (B, T, D)
    ctx = ctx.reshape(BT, D)

    att = jnp.dot(ctx.astype(mm_dtype), wo_ref[...],
                  preferred_element_type=jnp.float32) + bo_ref[...]
    # drop_shortcut: identity (drop_rate = 0.0)
    x1 = att + x

    # ---------------- feed-forward sub-block ----------------
    h2 = layernorm(x1, g2_ref[...], s2_ref[...])
    ff1 = jnp.dot(h2.astype(mm_dtype), w1_ref[...],
                  preferred_element_type=jnp.float32) + b1_ref[...]
    # GELU, tanh approximation (matches the reference GELU module)
    gelu = 0.5 * ff1 * (1.0 + jnp.tanh(jnp.sqrt(2.0 / jnp.pi) *
                                       (ff1 + 0.044715 * ff1 ** 3)))
    ff2 = jnp.dot(gelu.astype(mm_dtype), w2_ref[...],
                  preferred_element_type=jnp.float32) + b2_ref[...]

    o_ref[...] = (ff2 + x1).astype(o_ref.dtype)


def transformer_block(x, params, *, num_heads, matmul_dtype=jnp.bfloat16):
    """x: (B, T, D) float32. Weights stored as (d_in, d_out), biases (1, d_out)."""
    B, T, D = x.shape
    assert D % num_heads == 0, "emb_dim must be divisible by n_heads"

    mdt = matmul_dtype
    # fuse Q/K/V weights wrapper-side; cast matmul weights to the MXU dtype
    wqkv = jnp.concatenate([params["wq"], params["wk"], params["wv"]],
                           axis=1).astype(mdt)                      # (D, 3D)
    bqkv = jnp.concatenate([params["bq"], params["bk"], params["bv"]],
                           axis=1).astype(jnp.float32)              # (1, 3D)
    wo = params["wo"].astype(mdt)
    w1 = params["w1"].astype(mdt)
    w2 = params["w2"].astype(mdt)

    x_flat = x.reshape(B * T, D)

    kernel = functools.partial(transformer_block_kernel,
                               num_heads=num_heads, batch=B, seq=T)

    vmem = pl.BlockSpec(memory_space=pltpu.MemorySpace.VMEM)  # whole array in VMEM
    n_in = 13

    out_flat = pl.pallas_call(
        kernel,
        out_shape=jax.ShapeDtypeStruct((B * T, D), x.dtype),
        in_specs=[vmem] * n_in,
        out_specs=vmem,
        compiler_params=pltpu.CompilerParams(vmem_limit_bytes=64 * 1024 * 1024),
    )(x_flat, wqkv, bqkv,
      wo, params["bo"],
      params["g1"], params["s1"], params["g2"], params["s2"],
      w1, params["b1"], w2, params["b2"])

    return out_flat.reshape(B, T, D)


# ---------------- pure-JAX reference (same math as the PyTorch module) ----------------
def reference_block(x, p, *, num_heads):
    def ln(h, g, s):
        m = jnp.mean(h, axis=-1, keepdims=True)
        v = jnp.mean((h - m) ** 2, axis=-1, keepdims=True)
        return (h - m) / jnp.sqrt(v + EPS) * g + s

    B, T, D = x.shape
    hd = D // num_heads
    sc = x
    h = ln(x, p["g1"][0], p["s1"][0])
    q = h @ p["wq"] + p["bq"][0]
    k = h @ p["wk"] + p["bk"][0]
    v = h @ p["wv"] + p["bv"][0]
    q = q.reshape(B, T, num_heads, hd).transpose(0, 2, 1, 3)
    k = k.reshape(B, T, num_heads, hd).transpose(0, 2, 1, 3)
    v = v.reshape(B, T, num_heads, hd).transpose(0, 2, 1, 3)
    scores = jnp.einsum("bhtd,bhsd->bhts", q, k) / math.sqrt(hd)
    mask = jnp.triu(jnp.ones((T, T), bool), k=1)
    scores = jnp.where(mask, -jnp.inf, scores)
    attn = jax.nn.softmax(scores, axis=-1)
    ctx = jnp.einsum("bhts,bhsd->bhtd", attn, v).transpose(0, 2, 1, 3).reshape(B, T, D)
    x1 = ctx @ p["wo"] + p["bo"][0] + sc
    sc2 = x1
    h2 = ln(x1, p["g2"][0], p["s2"][0])
    ff1 = h2 @ p["w1"] + p["b1"][0]
    gelu = 0.5 * ff1 * (1.0 + jnp.tanh(jnp.sqrt(2.0 / jnp.pi) *
                                       (ff1 + 0.044715 * ff1 ** 3)))
    return gelu @ p["w2"] + p["b2"][0] + sc2


if __name__ == "__main__":
    # cfg: emb_dim=32, context_length=8, n_heads=4, drop_rate=0.0, qkv_bias=True
    B, T, D, NH = 2, 8, 32, 4
    H = 4 * D

    key = jax.random.PRNGKey(0)
    keys = jax.random.split(key, 16)
    std = 0.02
    params = {
        "wq": jax.random.normal(keys[0], (D, D), jnp.float32) * std,
        "bq": jax.random.normal(keys[1], (1, D), jnp.float32) * std,
        "wk": jax.random.normal(keys[2], (D, D), jnp.float32) * std,
        "bk": jax.random.normal(keys[3], (1, D), jnp.float32) * std,
        "wv": jax.random.normal(keys[4], (D, D), jnp.float32) * std,
        "bv": jax.random.normal(keys[5], (1, D), jnp.float32) * std,
        "wo": jax.random.normal(keys[6], (D, D), jnp.float32) * std,
        "bo": jax.random.normal(keys[7], (1, D), jnp.float32) * std,
        "g1": jnp.ones((1, D), jnp.float32),
        "s1": jnp.zeros((1, D), jnp.float32),
        "g2": jnp.ones((1, D), jnp.float32),
        "s2": jnp.zeros((1, D), jnp.float32),
        "w1": jax.random.normal(keys[8], (D, H), jnp.float32) * std,
        "b1": jax.random.normal(keys[9], (1, H), jnp.float32) * std,
        "w2": jax.random.normal(keys[10], (H, D), jnp.float32) * std,
        "b2": jax.random.normal(keys[11], (1, D), jnp.float32) * std,
    }

    x = jax.random.normal(keys[12], (B, T, D), jnp.float32)
    ref = reference_block(x, params, num_heads=NH)

    # f32 matmul path: faithful to the PyTorch module's arithmetic
    out_f32 = jax.block_until_ready(
        transformer_block(x, params, num_heads=NH, matmul_dtype=jnp.float32))
    assert out_f32.shape == (B, T, D)
    assert jnp.allclose(out_f32, ref, atol=1e-3, rtol=1e-3), "f32 mismatch vs reference"

    # bf16 matmul operands with f32 accumulation: the v6e/v7x MXU fast path
    out_bf16 = jax.block_until_ready(
        transformer_block(x, params, num_heads=NH, matmul_dtype=jnp.bfloat16))
    assert out_bf16.shape == (B, T, D)
    assert jnp.allclose(out_bf16, ref, atol=2e-2, rtol=2e-2), "bf16 mismatch vs reference"

    print("KERNEL_OK")
</pallas_src>

<mosaic_0001>
module attributes {stable_mosaic.version = 11 : i64} {
  func.func @transformer_block_kernel(%arg0: memref<16x32xf32, #tpu.memory_space<vmem>>, %arg1: memref<32x96xf32, #tpu.memory_space<vmem>>, %arg2: memref<1x96xf32, #tpu.memory_space<vmem>>, %arg3: memref<32x32xf32, #tpu.memory_space<vmem>>, %arg4: memref<1x32xf32, #tpu.memory_space<vmem>>, %arg5: memref<1x32xf32, #tpu.memory_space<vmem>>, %arg6: memref<1x32xf32, #tpu.memory_space<vmem>>, %arg7: memref<1x32xf32, #tpu.memory_space<vmem>>, %arg8: memref<1x32xf32, #tpu.memory_space<vmem>>, %arg9: memref<32x128xf32, #tpu.memory_space<vmem>>, %arg10: memref<1x128xf32, #tpu.memory_space<vmem>>, %arg11: memref<128x32xf32, #tpu.memory_space<vmem>>, %arg12: memref<1x32xf32, #tpu.memory_space<vmem>>, %arg13: memref<16x32xf32, #tpu.memory_space<vmem>>) attributes {dimension_semantics = [], scalar_prefetch = 0 : i64, scratch_operands = 0 : i64, tpu.core_type = #tpu.core_type<tc>} {
    %c0 = arith.constant 0 : index
    %c0_0 = arith.constant 0 : index
    %0 = vector.load %arg0[%c0, %c0_0] : memref<16x32xf32, #tpu.memory_space<vmem>>, vector<16x32xf32>
    %c0_1 = arith.constant 0 : index
    %c0_2 = arith.constant 0 : index
    %1 = vector.load %arg5[%c0_1, %c0_2] : memref<1x32xf32, #tpu.memory_space<vmem>>, vector<1x32xf32>
    %c0_3 = arith.constant 0 : index
    %c0_4 = arith.constant 0 : index
    %2 = vector.load %arg6[%c0_3, %c0_4] : memref<1x32xf32, #tpu.memory_space<vmem>>, vector<1x32xf32>
    %cst = arith.constant dense<0.000000e+00> : vector<16xf32>
    %3 = vector.multi_reduction <add>, %0, %cst [1] : vector<16x32xf32> to vector<16xf32>
    %4 = vector.shape_cast %3 : vector<16xf32> to vector<16x1xf32>
    %cst_5 = arith.constant 3.200000e+01 : f32
    %5 = vector.broadcast %cst_5 : f32 to vector<16x1xf32>
    %6 = arith.divf %4, %5 : vector<16x1xf32>
    %7 = arith.mulf %0, %0 : vector<16x32xf32>
    %cst_6 = arith.constant dense<0.000000e+00> : vector<16xf32>
    %8 = vector.multi_reduction <add>, %7, %cst_6 [1] : vector<16x32xf32> to vector<16xf32>
    %9 = vector.shape_cast %8 : vector<16xf32> to vector<16x1xf32>
    %cst_7 = arith.constant 3.200000e+01 : f32
    %10 = vector.broadcast %cst_7 : f32 to vector<16x1xf32>
    %11 = arith.divf %9, %10 : vector<16x1xf32>
    %12 = arith.mulf %6, %6 : vector<16x1xf32>
    %13 = arith.subf %11, %12 : vector<16x1xf32>
    %14 = vector.broadcast %6 : vector<16x1xf32> to vector<16x32xf32>
    %15 = arith.subf %0, %14 : vector<16x32xf32>
    %cst_8 = arith.constant 9.99999974E-6 : f32
    %16 = vector.broadcast %cst_8 : f32 to vector<16x1xf32>
    %17 = arith.addf %13, %16 : vector<16x1xf32>
    %18 = math.rsqrt %17 : vector<16x1xf32>
    %19 = vector.broadcast %18 : vector<16x1xf32> to vector<16x32xf32>
    %20 = arith.mulf %15, %19 : vector<16x32xf32>
    %21 = vector.broadcast %1 : vector<1x32xf32> to vector<16x32xf32>
    %22 = arith.mulf %20, %21 : vector<16x32xf32>
    %23 = vector.broadcast %2 : vector<1x32xf32> to vector<16x32xf32>
    %24 = arith.addf %22, %23 : vector<16x32xf32>
    %c0_9 = arith.constant 0 : index
    %c0_10 = arith.constant 0 : index
    %25 = vector.load %arg1[%c0_9, %c0_10] : memref<32x96xf32, #tpu.memory_space<vmem>>, vector<32x96xf32>
    %cst_11 = arith.constant dense<0.000000e+00> : vector<16x96xf32>
    %26 = tpu.matmul %24, %25, %cst_11 {dimension_numbers = #tpu.dot_dimension_numbers<[1], [0], [0], [1], [0, 0, 1, 1], [], []>} : vector<16x32xf32>, vector<32x96xf32>, vector<16x96xf32> -> vector<16x96xf32>
    %c0_12 = arith.constant 0 : index
    %c0_13 = arith.constant 0 : index
    %27 = vector.load %arg2[%c0_12, %c0_13] : memref<1x96xf32, #tpu.memory_space<vmem>>, vector<1x96xf32>
    %28 = vector.broadcast %27 : vector<1x96xf32> to vector<16x96xf32>
    %29 = arith.addf %26, %28 : vector<16x96xf32>
    %30 = vector.shape_cast %29 : vector<16x96xf32> to vector<2x8x96xf32>
    %31 = vector.extract_strided_slice %30 {offsets = [0, 0, 0], sizes = [2, 8, 8], strides = [1, 1, 1]} : vector<2x8x96xf32> to vector<2x8x8xf32>
    %32 = vector.extract_strided_slice %30 {offsets = [0, 0, 8], sizes = [2, 8, 8], strides = [1, 1, 1]} : vector<2x8x96xf32> to vector<2x8x8xf32>
    %33 = vector.extract_strided_slice %30 {offsets = [0, 0, 16], sizes = [2, 8, 8], strides = [1, 1, 1]} : vector<2x8x96xf32> to vector<2x8x8xf32>
    %34 = vector.extract_strided_slice %30 {offsets = [0, 0, 24], sizes = [2, 8, 8], strides = [1, 1, 1]} : vector<2x8x96xf32> to vector<2x8x8xf32>
    %35 = vector.shape_cast %31 : vector<2x8x8xf32> to vector<1x2x8x8xf32>
    %36 = vector.shape_cast %32 : vector<2x8x8xf32> to vector<1x2x8x8xf32>
    %37 = vector.shape_cast %33 : vector<2x8x8xf32> to vector<1x2x8x8xf32>
    %38 = vector.shape_cast %34 : vector<2x8x8xf32> to vector<1x2x8x8xf32>
    %39 = tpu.concatenate %35, %36, %37, %38 in 0 : vector<1x2x8x8xf32>, vector<1x2x8x8xf32>, vector<1x2x8x8xf32>, vector<1x2x8x8xf32> -> vector<4x2x8x8xf32>
    %40 = vector.shape_cast %39 : vector<4x2x8x8xf32> to vector<8x8x8xf32>
    %41 = vector.extract_strided_slice %30 {offsets = [0, 0, 32], sizes = [2, 8, 8], strides = [1, 1, 1]} : vector<2x8x96xf32> to vector<2x8x8xf32>
    %42 = vector.extract_strided_slice %30 {offsets = [0, 0, 40], sizes = [2, 8, 8], strides = [1, 1, 1]} : vector<2x8x96xf32> to vector<2x8x8xf32>
    %43 = vector.extract_strided_slice %30 {offsets = [0, 0, 48], sizes = [2, 8, 8], strides = [1, 1, 1]} : vector<2x8x96xf32> to vector<2x8x8xf32>
    %44 = vector.extract_strided_slice %30 {offsets = [0, 0, 56], sizes = [2, 8, 8], strides = [1, 1, 1]} : vector<2x8x96xf32> to vector<2x8x8xf32>
    %45 = vector.shape_cast %41 : vector<2x8x8xf32> to vector<1x2x8x8xf32>
    %46 = vector.shape_cast %42 : vector<2x8x8xf32> to vector<1x2x8x8xf32>
    %47 = vector.shape_cast %43 : vector<2x8x8xf32> to vector<1x2x8x8xf32>
    %48 = vector.shape_cast %44 : vector<2x8x8xf32> to vector<1x2x8x8xf32>
    %49 = tpu.concatenate %45, %46, %47, %48 in 0 : vector<1x2x8x8xf32>, vector<1x2x8x8xf32>, vector<1x2x8x8xf32>, vector<1x2x8x8xf32> -> vector<4x2x8x8xf32>
    %50 = vector.shape_cast %49 : vector<4x2x8x8xf32> to vector<8x8x8xf32>
    %51 = vector.extract_strided_slice %30 {offsets = [0, 0, 64], sizes = [2, 8, 8], strides = [1, 1, 1]} : vector<2x8x96xf32> to vector<2x8x8xf32>
    %52 = vector.extract_strided_slice %30 {offsets = [0, 0, 72], sizes = [2, 8, 8], strides = [1, 1, 1]} : vector<2x8x96xf32> to vector<2x8x8xf32>
    %53 = vector.extract_strided_slice %30 {offsets = [0, 0, 80], sizes = [2, 8, 8], strides = [1, 1, 1]} : vector<2x8x96xf32> to vector<2x8x8xf32>
    %54 = vector.extract_strided_slice %30 {offsets = [0, 0, 88], sizes = [2, 8, 8], strides = [1, 1, 1]} : vector<2x8x96xf32> to vector<2x8x8xf32>
    %55 = vector.shape_cast %51 : vector<2x8x8xf32> to vector<1x2x8x8xf32>
    %56 = vector.shape_cast %52 : vector<2x8x8xf32> to vector<1x2x8x8xf32>
    %57 = vector.shape_cast %53 : vector<2x8x8xf32> to vector<1x2x8x8xf32>
    %58 = vector.shape_cast %54 : vector<2x8x8xf32> to vector<1x2x8x8xf32>
    %59 = tpu.concatenate %55, %56, %57, %58 in 0 : vector<1x2x8x8xf32>, vector<1x2x8x8xf32>, vector<1x2x8x8xf32>, vector<1x2x8x8xf32> -> vector<4x2x8x8xf32>
    %60 = vector.shape_cast %59 : vector<4x2x8x8xf32> to vector<8x8x8xf32>
    "tpu.trace_start"() <{level = 10 : i32, message = "bqd,bkd->bqk"}> : () -> ()
    %cst_14 = arith.constant dense<0.000000e+00> : vector<8x8x8xf32>
    %61 = tpu.matmul %40, %50, %cst_14 {dimension_numbers = #tpu.dot_dimension_numbers<[2], [2], [1], [1], [0, 0, 0, 1, 1, 1], [0], [0]>} : vector<8x8x8xf32>, vector<8x8x8xf32>, vector<8x8x8xf32> -> vector<8x8x8xf32>
    "tpu.trace_stop"() : () -> ()
    %cst_15 = arith.constant 0.353553385 : f32
    %62 = vector.broadcast %cst_15 : f32 to vector<8x8x8xf32>
    %63 = arith.mulf %61, %62 : vector<8x8x8xf32>
    %64 = tpu.iota {dimensions = array<i32: 0>} : vector<8x8xi32>
    %65 = tpu.iota {dimensions = array<i32: 1>} : vector<8x8xi32>
    %66 = arith.cmpi sgt, %65, %64 : vector<8x8xi32>
    %cst_16 = arith.constant -1.000000e+30 : f32
    %67 = vector.shape_cast %66 : vector<8x8xi1> to vector<1x8x8xi1>
    %68 = vector.broadcast %67 : vector<1x8x8xi1> to vector<8x8x8xi1>
    %69 = vector.broadcast %cst_16 : f32 to vector<8x8x8xf32>
    %70 = arith.select %68, %69, %63 : vector<8x8x8xi1>, vector<8x8x8xf32>
    %cst_17 = arith.constant dense<0xFF800000> : vector<8x8xf32>
    %71 = vector.multi_reduction <maximumf>, %70, %cst_17 [2] : vector<8x8x8xf32> to vector<8x8xf32>
    %72 = vector.shape_cast %71 : vector<8x8xf32> to vector<8x8x1xf32>
    %73 = vector.broadcast %72 : vector<8x8x1xf32> to vector<8x8x8xf32>
    %74 = arith.subf %70, %73 : vector<8x8x8xf32>
    %75 = math.exp %74 : vector<8x8x8xf32>
    %cst_18 = arith.constant dense<0.000000e+00> : vector<8x8xf32>
    %76 = vector.multi_reduction <add>, %75, %cst_18 [2] : vector<8x8x8xf32> to vector<8x8xf32>
    %77 = vector.shape_cast %76 : vector<8x8xf32> to vector<8x8x1xf32>
    %78 = tpu.reciprocal %77 {approx = true} : vector<8x8x1xf32> -> vector<8x8x1xf32>
    %79 = vector.broadcast %78 : vector<8x8x1xf32> to vector<8x8x8xf32>
    %80 = arith.mulf %75, %79 : vector<8x8x8xf32>
    "tpu.trace_start"() <{level = 10 : i32, message = "bqk,bkd->bqd"}> : () -> ()
    %cst_19 = arith.constant dense<0.000000e+00> : vector<8x8x8xf32>
    %81 = tpu.matmul %80, %60, %cst_19 {dimension_numbers = #tpu.dot_dimension_numbers<[2], [1], [1], [2], [0, 0, 0, 1, 1, 2], [0], [0]>} : vector<8x8x8xf32>, vector<8x8x8xf32>, vector<8x8x8xf32> -> vector<8x8x8xf32>
    "tpu.trace_stop"() : () -> ()
    %82 = vector.shape_cast %81 : vector<8x8x8xf32> to vector<4x2x8x8xf32>
    %83 = vector.extract_strided_slice %82 {offsets = [0, 0, 0, 0], sizes = [1, 2, 8, 8], strides = [1, 1, 1, 1]} : vector<4x2x8x8xf32> to vector<1x2x8x8xf32>
    %84 = vector.shape_cast %83 : vector<1x2x8x8xf32> to vector<2x8x8xf32>
    %85 = vector.extract_strided_slice %82 {offsets = [1, 0, 0, 0], sizes = [1, 2, 8, 8], strides = [1, 1, 1, 1]} : vector<4x2x8x8xf32> to vector<1x2x8x8xf32>
    %86 = vector.shape_cast %85 : vector<1x2x8x8xf32> to vector<2x8x8xf32>
    %87 = vector.extract_strided_slice %82 {offsets = [2, 0, 0, 0], sizes = [1, 2, 8, 8], strides = [1, 1, 1, 1]} : vector<4x2x8x8xf32> to vector<1x2x8x8xf32>
    %88 = vector.shape_cast %87 : vector<1x2x8x8xf32> to vector<2x8x8xf32>
    %89 = vector.extract_strided_slice %82 {offsets = [3, 0, 0, 0], sizes = [1, 2, 8, 8], strides = [1, 1, 1, 1]} : vector<4x2x8x8xf32> to vector<1x2x8x8xf32>
    %90 = vector.shape_cast %89 : vector<1x2x8x8xf32> to vector<2x8x8xf32>
    %91 = tpu.concatenate %84, %86, %88, %90 in 2 : vector<2x8x8xf32>, vector<2x8x8xf32>, vector<2x8x8xf32>, vector<2x8x8xf32> -> vector<2x8x32xf32>
    %92 = vector.shape_cast %91 : vector<2x8x32xf32> to vector<16x32xf32>
    %c0_20 = arith.constant 0 : index
    %c0_21 = arith.constant 0 : index
    %93 = vector.load %arg3[%c0_20, %c0_21] : memref<32x32xf32, #tpu.memory_space<vmem>>, vector<32x32xf32>
    %cst_22 = arith.constant dense<0.000000e+00> : vector<16x32xf32>
    %94 = tpu.matmul %92, %93, %cst_22 {dimension_numbers = #tpu.dot_dimension_numbers<[1], [0], [0], [1], [0, 0, 1, 1], [], []>} : vector<16x32xf32>, vector<32x32xf32>, vector<16x32xf32> -> vector<16x32xf32>
    %c0_23 = arith.constant 0 : index
    %c0_24 = arith.constant 0 : index
    %95 = vector.load %arg4[%c0_23, %c0_24] : memref<1x32xf32, #tpu.memory_space<vmem>>, vector<1x32xf32>
    %96 = vector.broadcast %95 : vector<1x32xf32> to vector<16x32xf32>
    %97 = arith.addf %94, %96 : vector<16x32xf32>
    %98 = arith.addf %97, %0 : vector<16x32xf32>
    %c0_25 = arith.constant 0 : index
    %c0_26 = arith.constant 0 : index
    %99 = vector.load %arg7[%c0_25, %c0_26] : memref<1x32xf32, #tpu.memory_space<vmem>>, vector<1x32xf32>
    %c0_27 = arith.constant 0 : index
    %c0_28 = arith.constant 0 : index
    %100 = vector.load %arg8[%c0_27, %c0_28] : memref<1x32xf32, #tpu.memory_space<vmem>>, vector<1x32xf32>
    %cst_29 = arith.constant dense<0.000000e+00> : vector<16xf32>
    %101 = vector.multi_reduction <add>, %98, %cst_29 [1] : vector<16x32xf32> to vector<16xf32>
    %102 = vector.shape_cast %101 : vector<16xf32> to vector<16x1xf32>
    %cst_30 = arith.constant 3.200000e+01 : f32
    %103 = vector.broadcast %cst_30 : f32 to vector<16x1xf32>
    %104 = arith.divf %102, %103 : vector<16x1xf32>
    %105 = arith.mulf %98, %98 : vector<16x32xf32>
    %cst_31 = arith.constant dense<0.000000e+00> : vector<16xf32>
    %106 = vector.multi_reduction <add>, %105, %cst_31 [1] : vector<16x32xf32> to vector<16xf32>
    %107 = vector.shape_cast %106 : vector<16xf32> to vector<16x1xf32>
    %cst_32 = arith.constant 3.200000e+01 : f32
    %108 = vector.broadcast %cst_32 : f32 to vector<16x1xf32>
    %109 = arith.divf %107, %108 : vector<16x1xf32>
    %110 = arith.mulf %104, %104 : vector<16x1xf32>
    %111 = arith.subf %109, %110 : vector<16x1xf32>
    %112 = vector.broadcast %104 : vector<16x1xf32> to vector<16x32xf32>
    %113 = arith.subf %98, %112 : vector<16x32xf32>
    %cst_33 = arith.constant 9.99999974E-6 : f32
    %114 = vector.broadcast %cst_33 : f32 to vector<16x1xf32>
    %115 = arith.addf %111, %114 : vector<16x1xf32>
    %116 = math.rsqrt %115 : vector<16x1xf32>
    %117 = vector.broadcast %116 : vector<16x1xf32> to vector<16x32xf32>
    %118 = arith.mulf %113, %117 : vector<16x32xf32>
    %119 = vector.broadcast %99 : vector<1x32xf32> to vector<16x32xf32>
    %120 = arith.mulf %118, %119 : vector<16x32xf32>
    %121 = vector.broadcast %100 : vector<1x32xf32> to vector<16x32xf32>
    %122 = arith.addf %120, %121 : vector<16x32xf32>
    %c0_34 = arith.constant 0 : index
    %c0_35 = arith.constant 0 : index
    %123 = vector.load %arg9[%c0_34, %c0_35] : memref<32x128xf32, #tpu.memory_space<vmem>>, vector<32x128xf32>
    %cst_36 = arith.constant dense<0.000000e+00> : vector<16x128xf32>
    %124 = tpu.matmul %122, %123, %cst_36 {dimension_numbers = #tpu.dot_dimension_numbers<[1], [0], [0], [1], [0, 0, 1, 1], [], []>} : vector<16x32xf32>, vector<32x128xf32>, vector<16x128xf32> -> vector<16x128xf32>
    %c0_37 = arith.constant 0 : index
    %c0_38 = arith.constant 0 : index
    %125 = vector.load %arg10[%c0_37, %c0_38] : memref<1x128xf32, #tpu.memory_space<vmem>>, vector<1x128xf32>
    %126 = vector.broadcast %125 : vector<1x128xf32> to vector<16x128xf32>
    %127 = arith.addf %124, %126 : vector<16x128xf32>
    %cst_39 = arith.constant 5.000000e-01 : f32
    %128 = vector.broadcast %cst_39 : f32 to vector<16x128xf32>
    %129 = arith.mulf %128, %127 : vector<16x128xf32>
    %cst_40 = arith.constant 0.636619746 : f32
    %130 = math.sqrt %cst_40 : f32
    %131 = arith.mulf %127, %127 : vector<16x128xf32>
    %132 = arith.mulf %127, %131 : vector<16x128xf32>
    %cst_41 = arith.constant 4.471500e-02 : f32
    %133 = vector.broadcast %cst_41 : f32 to vector<16x128xf32>
    %134 = arith.mulf %133, %132 : vector<16x128xf32>
    %135 = arith.addf %127, %134 : vector<16x128xf32>
    %136 = vector.broadcast %130 : f32 to vector<16x128xf32>
    %137 = arith.mulf %136, %135 : vector<16x128xf32>
    %138 = math.tanh %137 : vector<16x128xf32>
    %cst_42 = arith.constant 1.000000e+00 : f32
    %139 = vector.broadcast %cst_42 : f32 to vector<16x128xf32>
    %140 = arith.addf %139, %138 : vector<16x128xf32>
    %141 = arith.mulf %129, %140 : vector<16x128xf32>
    %c0_43 = arith.constant 0 : index
    %c0_44 = arith.constant 0 : index
    %142 = vector.load %arg11[%c0_43, %c0_44] : memref<128x32xf32, #tpu.memory_space<vmem>>, vector<128x32xf32>
    %cst_45 = arith.constant dense<0.000000e+00> : vector<16x32xf32>
    %143 = tpu.matmul %141, %142, %cst_45 {dimension_numbers = #tpu.dot_dimension_numbers<[1], [0], [0], [1], [0, 0, 1, 1], [], []>} : vector<16x128xf32>, vector<128x32xf32>, vector<16x32xf32> -> vector<16x32xf32>
    %c0_46 = arith.constant 0 : index
    %c0_47 = arith.constant 0 : index
    %144 = vector.load %arg12[%c0_46, %c0_47] : memref<1x32xf32, #tpu.memory_space<vmem>>, vector<1x32xf32>
    %145 = vector.broadcast %144 : vector<1x32xf32> to vector<16x32xf32>
    %146 = arith.addf %143, %145 : vector<16x32xf32>
    %147 = arith.addf %146, %98 : vector<16x32xf32>
    %c0_48 = arith.constant 0 : index
    %c0_49 = arith.constant 0 : index
    %148 = vector.load %arg13[%c0_48, %c0_49] : memref<16x32xf32, #tpu.memory_space<vmem>>, vector<16x32xf32>
    tpu.vector_store %arg13[%c0_48, %c0_49], %147 {strides = array<i32>} : memref<16x32xf32, #tpu.memory_space<vmem>>, vector<16x32xf32>,
    return
  }
}

</mosaic_0001>

<llo_original>
// kernel: tpu_custom_call.1
$region0: #{tpu_custom_call.1}
  #allocation0 [shape = 'u32[]', space=smem, size = 0x4, offset = 0x4, fixed_abs, tag = 'smem constant byte address 0x4 - core index']
  #allocation1 [shape = 'u32[144,128]{1,0:T(1,128)}', space=vmem, size = 0x12000, scoped, tag = 'internal scratch']
  %s0 = inlined_call_operand.vmem [shape: f32[16,32], index: 0, kind: input, shape index: {}]
  %s1 = inlined_call_operand.vmem [shape: f32[32,96], index: 1, kind: input, shape index: {}]
  %s2 = inlined_call_operand.vmem [shape: f32[1,96], index: 2, kind: input, shape index: {}]
  %s3 = inlined_call_operand.vmem [shape: f32[32,32], index: 3, kind: input, shape index: {}]
  %s4 = inlined_call_operand.vmem [shape: f32[1,32], index: 4, kind: input, shape index: {}]
  %s5 = inlined_call_operand.vmem [shape: f32[1,32], index: 5, kind: input, shape index: {}]
  %s6 = inlined_call_operand.vmem [shape: f32[1,32], index: 6, kind: input, shape index: {}]
  %s7 = inlined_call_operand.vmem [shape: f32[1,32], index: 7, kind: input, shape index: {}]
  %s8 = inlined_call_operand.vmem [shape: f32[1,32], index: 8, kind: input, shape index: {}]
  %s9 = inlined_call_operand.vmem [shape: f32[32,128], index: 9, kind: input, shape index: {}]
  %s10 = inlined_call_operand.vmem [shape: f32[1,128], index: 10, kind: input, shape index: {}]
  %s11 = inlined_call_operand.vmem [shape: f32[128,32], index: 11, kind: input, shape index: {}]
  %s12 = inlined_call_operand.vmem [shape: f32[1,32], index: 12, kind: input, shape index: {}]
  %s13 = inlined_call_operand.hbm [shape: f32[16,32], index: 13, kind: output, shape index: {}]
  %s14 = sld [smem:[#allocation0]]
  $region62: #{tpu_custom_call.1} parent=0
    _
  %s16 = ssub.s32 1, %s14
  %s17 = scalar_select 0, %s16, %s14
  $region1: #{tpu_custom_call.1} parent=0
    #allocation2 [shape = 'u8[8192]{0}', space=vmem, size = 0x2000, scoped, tag = 'output window, operand 0, single buffered']
    #allocation3 [shape = 's32[1]{0}', space=sflag, size = 0x4, scoped, tag = 'scoped memory for tpu_custom_call.1']
    %18 = vsyncpa [#allocation3], 0
    // Predicated region
    $region2: #{tpu_custom_call.1} parent=1 // pred_check
      _
    $region3: #{tpu_custom_call.1} parent=1 // pred_check_branch
      %20 = sbr.rel (0) target = $region5
    $region4: #{tpu_custom_call.1} parent=1 // pred_region
      _
    $region5: #{tpu_custom_call.1} parent=1 // pred_fallthru
      _
    // Predicated region
    $region6: #{tpu_custom_call.1} parent=1 // pred_check
      _
    $region7: #{tpu_custom_call.1} parent=1 // pred_check_branch
      %22 = sbr.rel (0) target = $region9
    $region8: #{tpu_custom_call.1} parent=1 // pred_region
      _
    $region9: #{tpu_custom_call.1} parent=1 // pred_fallthru
      _
    // Predicated region
    $region10: #{tpu_custom_call.1} parent=1 // pred_check
      _
    $region11: #{tpu_custom_call.1} parent=1 // pred_check_branch
      %24 = sbr.rel (0) target = $region13
    $region12: #{tpu_custom_call.1} parent=1 // pred_region
      _
    $region13: #{tpu_custom_call.1} parent=1 // pred_fallthru
      _
    // Predicated region
    $region14: #{tpu_custom_call.1} parent=1 // pred_check
      _
    $region15: #{tpu_custom_call.1} parent=1 // pred_check_branch
      %26 = sbr.rel (0) target = $region17
    $region16: #{tpu_custom_call.1} parent=1 // pred_region
      _
    $region17: #{tpu_custom_call.1} parent=1 // pred_fallthru
      _
    // Predicated region
    $region18: #{tpu_custom_call.1} parent=1 // pred_check
      _
    $region19: #{tpu_custom_call.1} parent=1 // pred_check_branch
      %28 = sbr.rel (0) target = $region21
    $region20: #{tpu_custom_call.1} parent=1 // pred_region
      _
    $region21: #{tpu_custom_call.1} parent=1 // pred_fallthru
      _
    // Predicated region
    $region22: #{tpu_custom_call.1} parent=1 // pred_check
      _
    $region23: #{tpu_custom_call.1} parent=1 // pred_check_branch
      %30 = sbr.rel (0) target = $region25
    $region24: #{tpu_custom_call.1} parent=1 // pred_region
      _
    $region25: #{tpu_custom_call.1} parent=1 // pred_fallthru
      _
    // Predicated region
    $region26: #{tpu_custom_call.1} parent=1 // pred_check
      _
    $region27: #{tpu_custom_call.1} parent=1 // pred_check_branch
      %32 = sbr.rel (0) target = $region29
    $region28: #{tpu_custom_call.1} parent=1 // pred_region
      _
    $region29: #{tpu_custom_call.1} parent=1 // pred_fallthru
      _
    // Predicated region
    $region30: #{tpu_custom_call.1} parent=1 // pred_check
      _
    $region31: #{tpu_custom_call.1} parent=1 // pred_check_branch
      %34 = sbr.rel (0) target = $region33
    $region32: #{tpu_custom_call.1} parent=1 // pred_region
      _
    $region33: #{tpu_custom_call.1} parent=1 // pred_fallthru
      _
    // Predicated region
    $region34: #{tpu_custom_call.1} parent=1 // pred_check
      _
    $region35: #{tpu_custom_call.1} parent=1 // pred_check_branch
      %36 = sbr.rel (0) target = $region37
    $region36: #{tpu_custom_call.1} parent=1 // pred_region
      _
    $region37: #{tpu_custom_call.1} parent=1 // pred_fallthru
      _
    // Predicated region
    $region38: #{tpu_custom_call.1} parent=1 // pred_check
      _
    $region39: #{tpu_custom_call.1} parent=1 // pred_check_branch
      %38 = sbr.rel (0) target = $region41
    $region40: #{tpu_custom_call.1} parent=1 // pred_region
      _
    $region41: #{tpu_custom_call.1} parent=1 // pred_fallthru
      _
    // Predicated region
    $region42: #{tpu_custom_call.1} parent=1 // pred_check
      _
    $region43: #{tpu_custom_call.1} parent=1 // pred_check_branch
      %40 = sbr.rel (0) target = $region45
    $region44: #{tpu_custom_call.1} parent=1 // pred_region
      _
    $region45: #{tpu_custom_call.1} parent=1 // pred_fallthru
      _
    // Predicated region
    $region46: #{tpu_custom_call.1} parent=1 // pred_check
      _
    $region47: #{tpu_custom_call.1} parent=1 // pred_check_branch
      %42 = sbr.rel (0) target = $region49
    $region48: #{tpu_custom_call.1} parent=1 // pred_region
      _
    $region49: #{tpu_custom_call.1} parent=1 // pred_fallthru
      _
    // Predicated region
    $region50: #{tpu_custom_call.1} parent=1 // pred_check
      _
    $region51: #{tpu_custom_call.1} parent=1 // pred_check_branch
      %44 = sbr.rel (0) target = $region53
    $region52: #{tpu_custom_call.1} parent=1 // pred_region
      _
    $region53: #{tpu_custom_call.1} parent=1 // pred_fallthru
      _
    %v45 = vld [vmem:[%s0] sm:$0xff]
    %v46 = vld [vmem:[%s0 + $0x8] sm:$0xff]
    %v47 = vld [vmem:[%s5] sm:$0x1]
    %v48 = vld [vmem:[%s6] sm:$0x1]
    %vm49 = vcmask 261120
    %v50 = vsel %vm49, %v45, 0.0
    %51 = vadd.xlane.f32.xlu0 %v50
    %v52 = vpop.xlane.xlu0 %51
    %v53 = vsel %vm49, %v46, 0.0
    %54 = vadd.xlane.f32.xlu0 %v53
    %v55 = vpop.xlane.xlu0 %54
    %v56 = vrcp.pop 32.0
    %v57 = vmul.f32 %v52, %v56
    %v58 = vmul.f32 %v55, %v56
    %v59 = vmul.f32 %v45, %v45
    %v60 = vmul.f32 %v46, %v46
    %v61 = vsel %vm49, %v59, 0.0
    %62 = vadd.xlane.f32.xlu0 %v61
    %v63 = vpop.xlane.xlu0 %62
    %v64 = vsel %vm49, %v60, 0.0
    %65 = vadd.xlane.f32.xlu0 %v64
    %v66 = vpop.xlane.xlu0 %65
    %v67 = vmul.f32 %v63, %v56
    %v68 = vmul.f32 %v66, %v56
    %v69 = vmul.f32 %v57, %v57
    %v70 = vmul.f32 %v58, %v58
    %v71 = vsub.f32 %v67, %v69
    %v72 = vsub.f32 %v68, %v70
    %v73 = vsub.f32 %v45, %v57
    %v74 = vsub.f32 %v46, %v58
    %v75 = vadd.f32 %v71, 1e-05
    %v76 = vadd.f32 %v72, 1e-05
    %v77 = vrsqrt.pop %v75
    %v78 = vrsqrt.pop %v76
    %v79 = vmul.f32 %v73, %v77
    %v80 = vmul.f32 %v74, %v78
    %v82 = vlaneseq
    %v83 = vshrl.u32 %v82, 7
    %v84 = vsub.s32 0, %v83
    %v85 = vrot.slane %v47, %v84
    %v87 = vmul.f32 %v79, %v85
    %v88 = vmul.f32 %v80, %v85
    %v90 = vlaneseq
    %v91 = vshrl.u32 %v90, 7
    %v92 = vsub.s32 0, %v91
    %v93 = vrot.slane %v48, %v92
    %v95 = vadd.f32 %v87, %v93
    %v96 = vadd.f32 %v88, %v93
    %v97 = vld [vmem:[%s1] sm:$0xff]
    %v98 = vld [vmem:[%s1 + $0x8] sm:$0xff]
    %v99 = vld [vmem:[%s1 + $0x10] sm:$0xff]
    %v100 = vld [vmem:[%s1 + $0x18] sm:$0xff]
    %v101 = vld [vmem:[%s2] sm:$0x1]
    %v103 = vlaneseq
    %v104 = vshrl.u32 %v103, 7
    %v105 = vsub.s32 0, %v104
    %v106 = vrot.slane %v101, %v105
    %v109 = vsel %vm49, %v95, 0
    %v112 = vsel %vm49, %v96, 0
    %114 = vmatprep.subr.mxu0 0.0
    %115 = vmatpush1.msra.mxu0 0.0
    %116 = vmatprep.subr.mxu0 0.0
    %117 = vmatpush1.msra.mxu0 0.0
    %118 = vmatprep.subr.mxu0 0.0
    %119 = vmatpush1.msra.mxu0 0.0
    %120 = vmatprep.subr.mxu0 0.0
    %121 = vmatpush1.msra.mxu0 0.0
    %122 = vmatprep.subr.mxu0 0.0
    %123 = vmatpush1.msra.mxu0 0.0
    %124 = vmatprep.subr.mxu0 0.0
    %125 = vmatpush1.msra.mxu0 0.0
    %126 = vmatprep.subr.mxu0 0.0
    %127 = vmatpush1.msra.mxu0 0.0
    %128 = vmatprep.subr.mxu0 0.0
    %129 = vmatpush1.msra.mxu0 0.0
    %130 = vmatprep.subr.mxu0 0.0
    %131 = vmatpush1.msra.mxu0 0.0
    %132 = vmatprep.subr.mxu0 0.0
    %133 = vmatpush1.msra.mxu0 0.0
    %134 = vmatprep.subr.mxu0 0.0
    %135 = vmatpush1.msra.mxu0 0.0
    %136 = vmatprep.subr.mxu0 0.0
    %137 = vmatpush1.msra.mxu0 0.0
    %138 = vmatprep.subr.mxu0 0.0
    %139 = vmatpush1.msra.mxu0 %v100
    %140 = vmatprep.subr.mxu0 0.0
    %141 = vmatpush1.msra.mxu0 %v99
    %142 = vmatprep.subr.mxu0 0.0
    %143 = vmatpush1.msra.mxu0 %v98
    %144 = vmatprep.subr.mxu0 0.0
    %145 = vmatpush1.msra.mxu0 %v97
    %146 = vmatprep.subr.mxu0 0.0
    %147 = vmatpush2.msra.mxu0 0.0
    %148 = vmatprep.subr.mxu0 0.0
    %149 = vmatpush2.msra.mxu0 0.0
    %150 = vmatprep.subr.mxu0 0.0
    %151 = vmatpush2.msra.mxu0 0.0
    %152 = vmatprep.subr.mxu0 0.0
    %153 = vmatpush2.msra.mxu0 0.0
    %154 = vmatprep.subr.mxu0 0.0
    %155 = vmatpush2.msra.mxu0 0.0
    %156 = vmatprep.subr.mxu0 0.0
    %157 = vmatpush2.msra.mxu0 0.0
    %158 = vmatprep.subr.mxu0 0.0
    %159 = vmatpush2.msra.mxu0 0.0
    %160 = vmatprep.subr.mxu0 0.0
    %161 = vmatpush2.msra.mxu0 0.0
    %162 = vmatprep.subr.mxu0 0.0
    %163 = vmatpush2.msra.mxu0 0.0
    %164 = vmatprep.subr.mxu0 0.0
    %165 = vmatpush2.msra.mxu0 0.0
    %166 = vmatprep.subr.mxu0 0.0
    %167 = vmatpush2.msra.mxu0 0.0
    %168 = vmatprep.subr.mxu0 0.0
    %169 = vmatpush2.msra.mxu0 0.0
    %170 = vmatprep.subr.mxu0 0.0
    %171 = vmatpush2.msra.mxu0 0.0
    %172 = vmatprep.subr.mxu0 0.0
    %173 = vmatpush2.msra.mxu0 0.0
    %174 = vmatprep.subr.mxu0 0.0
    %175 = vmatpush2.msra.mxu0 0.0
    %176 = vmatprep.subr.mxu0 0.0
    %177 = vmatpush2.msra.mxu0 0.0
    %178 = vmatprep.mubr.f32.mxu0 0.0
    %179 = vmatmul.mubr.f32.gmra.mxu0 %v109
    %v180 = vpop.f32.mrf.mxu0
    %v181 = vadd.f32 %v106, %v180
    %v182 = vpop.f32.mrf.mxu0
    %183 = vmatprep.mubr.f32.mxu0 0.0
    %184 = vmatmul.mubr.f32.gmra.mxu0 %v112
    %v185 = vpop.f32.mrf.mxu0
    %v186 = vadd.f32 %v106, %v185
    %v187 = vpop.f32.mrf.mxu0
    %188 = vdwg.mxu0
    %191 = vrot.lane.b32.xlu0 %v181, 120
    %v192 = vpop.permute.xlu0 %191
    %193 = vrot.lane.b32.xlu0 %v186, 120
    %v194 = vpop.permute.xlu0 %193
    %195 = vrot.lane.b32.xlu0 %v181, 112
    %v196 = vpop.permute.xlu0 %195
    %197 = vrot.lane.b32.xlu0 %v186, 112
    %v198 = vpop.permute.xlu0 %197
    %199 = vrot.lane.b32.xlu0 %v181, 104
    %v200 = vpop.permute.xlu0 %199
    %201 = vrot.lane.b32.xlu0 %v186, 104
    %v202 = vpop.permute.xlu0 %201
    %203 = vrot.lane.b32.xlu0 %v181, 96
    %v204 = vpop.permute.xlu0 %203
    %vm205 = vcmask 64512
    %v206 = vsel %vm205, %v181, 0
    %v208 = vsel %vm205, %v204, 0
    %210 = vmatprep.subr.mxu0 0.0
    %211 = vmatpush1.xpose.msra.mxu0 0.0
    %212 = vmatprep.subr.mxu0 0.0
    %213 = vmatpush1.xpose.msra.mxu0 0.0
    %214 = vmatprep.subr.mxu0 0.0
    %215 = vmatpush1.xpose.msra.mxu0 0.0
    %216 = vmatprep.subr.mxu0 0.0
    %217 = vmatpush1.xpose.msra.mxu0 0.0
    %218 = vmatprep.subr.mxu0 0.0
    %219 = vmatpush1.xpose.msra.mxu0 0.0
    %220 = vmatprep.subr.mxu0 0.0
    %221 = vmatpush1.xpose.msra.mxu0 0.0
    %222 = vmatprep.subr.mxu0 0.0
    %223 = vmatpush1.xpose.msra.mxu0 0.0
    %224 = vmatprep.subr.mxu0 0.0
    %225 = vmatpush1.xpose.msra.mxu0 0.0
    %226 = vmatprep.subr.mxu0 0.0
    %227 = vmatpush1.xpose.msra.mxu0 0.0
    %228 = vmatprep.subr.mxu0 0.0
    %229 = vmatpush1.xpose.msra.mxu0 0.0
    %230 = vmatprep.subr.mxu0 0.0
    %231 = vmatpush1.xpose.msra.mxu0 0.0
    %232 = vmatprep.subr.mxu0 0.0
    %233 = vmatpush1.xpose.msra.mxu0 0.0
    %234 = vmatprep.subr.mxu0 0.0
    %235 = vmatpush1.xpose.msra.mxu0 0.0
    %236 = vmatprep.subr.mxu0 0.0
    %237 = vmatpush1.xpose.msra.mxu0 0.0
    %238 = vmatprep.subr.mxu0 0.0
    %239 = vmatpush1.xpose.msra.mxu0 0.0
    %240 = vmatprep.subr.mxu0 0.0
    %241 = vmatpush1.xpose.msra.mxu0 %v208
    %242 = vmatprep.subr.mxu0 0.0
    %243 = vmatpush2.xpose.msra.mxu0 0.0
    %244 = vmatprep.subr.mxu0 0.0
    %245 = vmatpush2.xpose.msra.mxu0 0.0
    %246 = vmatprep.subr.mxu0 0.0
    %247 = vmatpush2.xpose.msra.mxu0 0.0
    %248 = vmatprep.subr.mxu0 0.0
    %249 = vmatpush2.xpose.msra.mxu0 0.0
    %250 = vmatprep.subr.mxu0 0.0
    %251 = vmatpush2.xpose.msra.mxu0 0.0
    %252 = vmatprep.subr.mxu0 0.0
    %253 = vmatpush2.xpose.msra.mxu0 0.0
    %254 = vmatprep.subr.mxu0 0.0
    %255 = vmatpush2.xpose.msra.mxu0 0.0
    %256 = vmatprep.subr.mxu0 0.0
    %257 = vmatpush2.xpose.msra.mxu0 0.0
    %258 = vmatprep.subr.mxu0 0.0
    %259 = vmatpush2.xpose.msra.mxu0 0.0
    %260 = vmatprep.subr.mxu0 0.0
    %261 = vmatpush2.xpose.msra.mxu0 0.0
    %262 = vmatprep.subr.mxu0 0.0
    %263 = vmatpush2.xpose.msra.mxu0 0.0
    %264 = vmatprep.subr.mxu0 0.0
    %265 = vmatpush2.xpose.msra.mxu0 0.0
    %266 = vmatprep.subr.mxu0 0.0
    %267 = vmatpush2.xpose.msra.mxu0 0.0
    %268 = vmatprep.subr.mxu0 0.0
    %269 = vmatpush2.xpose.msra.mxu0 0.0
    %270 = vmatprep.subr.mxu0 0.0
    %271 = vmatpush2.xpose.msra.mxu0 0.0
    %272 = vmatprep.subr.mxu0 0.0
    %273 = vmatpush2.xpose.msra.mxu0 0.0
    %274 = vmatprep.mubr.f32.mxu0 0.0
    %275 = vmatmul.mubr.f32.gmra.mxu0 %v206
    %v276 = vpop.f32.mrf.mxu0
    %v277 = vadd.f32 0.0, %v276
    %v278 = vpop.f32.mrf.mxu0
    %279 = vdwg.mxu0
    %280 = vrot.lane.b32.xlu0 %v186, 96
    %v281 = vpop.permute.xlu0 %280
    %v282 = vsel %vm205, %v186, 0
    %v284 = vsel %vm205, %v281, 0
    %286 = vmatprep.subr.mxu0 0.0
    %287 = vmatpush1.xpose.msra.mxu0 0.0
    %288 = vmatprep.subr.mxu0 0.0
    %289 = vmatpush1.xpose.msra.mxu0 0.0
    %290 = vmatprep.subr.mxu0 0.0
    %291 = vmatpush1.xpose.msra.mxu0 0.0
    %292 = vmatprep.subr.mxu0 0.0
    %293 = vmatpush1.xpose.msra.mxu0 0.0
    %294 = vmatprep.subr.mxu0 0.0
    %295 = vmatpush1.xpose.msra.mxu0 0.0
    %296 = vmatprep.subr.mxu0 0.0
    %297 = vmatpush1.xpose.msra.mxu0 0.0
    %298 = vmatprep.subr.mxu0 0.0
    %299 = vmatpush1.xpose.msra.mxu0 0.0
    %300 = vmatprep.subr.mxu0 0.0
    %301 = vmatpush1.xpose.msra.mxu0 0.0
    %302 = vmatprep.subr.mxu0 0.0
    %303 = vmatpush1.xpose.msra.mxu0 0.0
    %304 = vmatprep.subr.mxu0 0.0
    %305 = vmatpush1.xpose.msra.mxu0 0.0
    %306 = vmatprep.subr.mxu0 0.0
    %307 = vmatpush1.xpose.msra.mxu0 0.0
    %308 = vmatprep.subr.mxu0 0.0
    %309 = vmatpush1.xpose.msra.mxu0 0.0
    %310 = vmatprep.subr.mxu0 0.0
    %311 = vmatpush1.xpose.msra.mxu0 0.0
    %312 = vmatprep.subr.mxu0 0.0
    %313 = vmatpush1.xpose.msra.mxu0 0.0
    %314 = vmatprep.subr.mxu0 0.0
    %315 = vmatpush1.xpose.msra.mxu0 0.0
    %316 = vmatprep.subr.mxu0 0.0
    %317 = vmatpush1.xpose.msra.mxu0 %v284
    %318 = vmatprep.subr.mxu0 0.0
    %319 = vmatpush2.xpose.msra.mxu0 0.0
    %320 = vmatprep.subr.mxu0 0.0
    %321 = vmatpush2.xpose.msra.mxu0 0.0
    %322 = vmatprep.subr.mxu0 0.0
    %323 = vmatpush2.xpose.msra.mxu0 0.0
    %324 = vmatprep.subr.mxu0 0.0
    %325 = vmatpush2.xpose.msra.mxu0 0.0
    %326 = vmatprep.subr.mxu0 0.0
    %327 = vmatpush2.xpose.msra.mxu0 0.0
    %328 = vmatprep.subr.mxu0 0.0
    %329 = vmatpush2.xpose.msra.mxu0 0.0
    %330 = vmatprep.subr.mxu0 0.0
    %331 = vmatpush2.xpose.msra.mxu0 0.0
    %332 = vmatprep.subr.mxu0 0.0
    %333 = vmatpush2.xpose.msra.mxu0 0.0
    %334 = vmatprep.subr.mxu0 0.0
    %335 = vmatpush2.xpose.msra.mxu0 0.0
    %336 = vmatprep.subr.mxu0 0.0
    %337 = vmatpush2.xpose.msra.mxu0 0.0
    %338 = vmatprep.subr.mxu0 0.0
    %339 = vmatpush2.xpose.msra.mxu0 0.0
    %340 = vmatprep.subr.mxu0 0.0
    %341 = vmatpush2.xpose.msra.mxu0 0.0
    %342 = vmatprep.subr.mxu0 0.0
    %343 = vmatpush2.xpose.msra.mxu0 0.0
    %344 = vmatprep.subr.mxu0 0.0
    %345 = vmatpush2.xpose.msra.mxu0 0.0
    %346 = vmatprep.subr.mxu0 0.0
    %347 = vmatpush2.xpose.msra.mxu0 0.0
    %348 = vmatprep.subr.mxu0 0.0
    %349 = vmatpush2.xpose.msra.mxu0 0.0
    %350 = vmatprep.mubr.f32.mxu0 0.0
    %351 = vmatmul.mubr.f32.gmra.mxu0 %v282
    %v352 = vpop.f32.mrf.mxu0
    %v353 = vadd.f32 0.0, %v352
    %v354 = vpop.f32.mrf.mxu0
    %355 = vdwg.mxu0
    %356 = vrot.lane.b32.xlu0 %v192, 96
    %v357 = vpop.permute.xlu0 %356
    %v358 = vsel %vm205, %v192, 0
    %v360 = vsel %vm205, %v357, 0
    %362 = vmatprep.subr.mxu0 0.0
    %363 = vmatpush1.xpose.msra.mxu0 0.0
    %364 = vmatprep.subr.mxu0 0.0
    %365 = vmatpush1.xpose.msra.mxu0 0.0
    %366 = vmatprep.subr.mxu0 0.0
    %367 = vmatpush1.xpose.msra.mxu0 0.0
    %368 = vmatprep.subr.mxu0 0.0
    %369 = vmatpush1.xpose.msra.mxu0 0.0
    %370 = vmatprep.subr.mxu0 0.0
    %371 = vmatpush1.xpose.msra.mxu0 0.0
    %372 = vmatprep.subr.mxu0 0.0
    %373 = vmatpush1.xpose.msra.mxu0 0.0
    %374 = vmatprep.subr.mxu0 0.0
    %375 = vmatpush1.xpose.msra.mxu0 0.0
    %376 = vmatprep.subr.mxu0 0.0
    %377 = vmatpush1.xpose.msra.mxu0 0.0
    %378 = vmatprep.subr.mxu0 0.0
    %379 = vmatpush1.xpose.msra.mxu0 0.0
    %380 = vmatprep.subr.mxu0 0.0
    %381 = vmatpush1.xpose.msra.mxu0 0.0
    %382 = vmatprep.subr.mxu0 0.0
    %383 = vmatpush1.xpose.msra.mxu0 0.0
    %384 = vmatprep.subr.mxu0 0.0
    %385 = vmatpush1.xpose.msra.mxu0 0.0
    %386 = vmatprep.subr.mxu0 0.0
    %387 = vmatpush1.xpose.msra.mxu0 0.0
    %388 = vmatprep.subr.mxu0 0.0
    %389 = vmatpush1.xpose.msra.mxu0 0.0
    %390 = vmatprep.subr.mxu0 0.0
    %391 = vmatpush1.xpose.msra.mxu0 0.0
    %392 = vmatprep.subr.mxu0 0.0
    %393 = vmatpush1.xpose.msra.mxu0 %v360
    %394 = vmatprep.subr.mxu0 0.0
    %395 = vmatpush2.xpose.msra.mxu0 0.0
    %396 = vmatprep.subr.mxu0 0.0
    %397 = vmatpush2.xpose.msra.mxu0 0.0
    %398 = vmatprep.subr.mxu0 0.0
    %399 = vmatpush2.xpose.msra.mxu0 0.0
    %400 = vmatprep.subr.mxu0 0.0
    %401 = vmatpush2.xpose.msra.mxu0 0.0
    %402 = vmatprep.subr.mxu0 0.0
    %403 = vmatpush2.xpose.msra.mxu0 0.0
    %404 = vmatprep.subr.mxu0 0.0
    %405 = vmatpush2.xpose.msra.mxu0 0.0
    %406 = vmatprep.subr.mxu0 0.0
    %407 = vmatpush2.xpose.msra.mxu0 0.0
    %408 = vmatprep.subr.mxu0 0.0
    %409 = vmatpush2.xpose.msra.mxu0 0.0
    %410 = vmatprep.subr.mxu0 0.0
    %411 = vmatpush2.xpose.msra.mxu0 0.0
    %412 = vmatprep.subr.mxu0 0.0
    %413 = vmatpush2.xpose.msra.mxu0 0.0
    %414 = vmatprep.subr.mxu0 0.0
    %415 = vmatpush2.xpose.msra.mxu0 0.0
    %416 = vmatprep.subr.mxu0 0.0
    %417 = vmatpush2.xpose.msra.mxu0 0.0
    %418 = vmatprep.subr.mxu0 0.0
    %419 = vmatpush2.xpose.msra.mxu0 0.0
    %420 = vmatprep.subr.mxu0 0.0
    %421 = vmatpush2.xpose.msra.mxu0 0.0
    %422 = vmatprep.subr.mxu0 0.0
    %423 = vmatpush2.xpose.msra.mxu0 0.0
    %424 = vmatprep.subr.mxu0 0.0
    %425 = vmatpush2.xpose.msra.mxu0 0.0
    %426 = vmatprep.mubr.f32.mxu0 0.0
    %427 = vmatmul.mubr.f32.gmra.mxu0 %v358
    %v428 = vpop.f32.mrf.mxu0
    %v429 = vadd.f32 0.0, %v428
    %v430 = vpop.f32.mrf.mxu0
    %431 = vdwg.mxu0
    %432 = vrot.lane.b32.xlu0 %v194, 96
    %v433 = vpop.permute.xlu0 %432
    %v434 = vsel %vm205, %v194, 0
    %v436 = vsel %vm205, %v433, 0
    %438 = vmatprep.subr.mxu0 0.0
    %439 = vmatpush1.xpose.msra.mxu0 0.0
    %440 = vmatprep.subr.mxu0 0.0
    %441 = vmatpush1.xpose.msra.mxu0 0.0
    %442 = vmatprep.subr.mxu0 0.0
    %443 = vmatpush1.xpose.msra.mxu0 0.0
    %444 = vmatprep.subr.mxu0 0.0
    %445 = vmatpush1.xpose.msra.mxu0 0.0
    %446 = vmatprep.subr.mxu0 0.0
    %447 = vmatpush1.xpose.msra.mxu0 0.0
    %448 = vmatprep.subr.mxu0 0.0
    %449 = vmatpush1.xpose.msra.mxu0 0.0
    %450 = vmatprep.subr.mxu0 0.0
    %451 = vmatpush1.xpose.msra.mxu0 0.0
    %452 = vmatprep.subr.mxu0 0.0
    %453 = vmatpush1.xpose.msra.mxu0 0.0
    %454 = vmatprep.subr.mxu0 0.0
    %455 = vmatpush1.xpose.msra.mxu0 0.0
    %456 = vmatprep.subr.mxu0 0.0
    %457 = vmatpush1.xpose.msra.mxu0 0.0
    %458 = vmatprep.subr.mxu0 0.0
    %459 = vmatpush1.xpose.msra.mxu0 0.0
    %460 = vmatprep.subr.mxu0 0.0
    %461 = vmatpush1.xpose.msra.mxu0 0.0
    %462 = vmatprep.subr.mxu0 0.0
    %463 = vmatpush1.xpose.msra.mxu0 0.0
    %464 = vmatprep.subr.mxu0 0.0
    %465 = vmatpush1.xpose.msra.mxu0 0.0
    %466 = vmatprep.subr.mxu0 0.0
    %467 = vmatpush1.xpose.msra.mxu0 0.0
    %468 = vmatprep.subr.mxu0 0.0
    %469 = vmatpush1.xpose.msra.mxu0 %v436
    %470 = vmatprep.subr.mxu0 0.0
    %471 = vmatpush2.xpose.msra.mxu0 0.0
    %472 = vmatprep.subr.mxu0 0.0
    %473 = vmatpush2.xpose.msra.mxu0 0.0
    %474 = vmatprep.subr.mxu0 0.0
    %475 = vmatpush2.xpose.msra.mxu0 0.0
    %476 = vmatprep.subr.mxu0 0.0
    %477 = vmatpush2.xpose.msra.mxu0 0.0
    %478 = vmatprep.subr.mxu0 0.0
    %479 = vmatpush2.xpose.msra.mxu0 0.0
    %480 = vmatprep.subr.mxu0 0.0
    %481 = vmatpush2.xpose.msra.mxu0 0.0
    %482 = vmatprep.subr.mxu0 0.0
    %483 = vmatpush2.xpose.msra.mxu0 0.0
    %484 = vmatprep.subr.mxu0 0.0
    %485 = vmatpush2.xpose.msra.mxu0 0.0
    %486 = vmatprep.subr.mxu0 0.0
    %487 = vmatpush2.xpose.msra.mxu0 0.0
    %488 = vmatprep.subr.mxu0 0.0
    %489 = vmatpush2.xpose.msra.mxu0 0.0
    %490 = vmatprep.subr.mxu0 0.0
    %491 = vmatpush2.xpose.msra.mxu0 0.0
    %492 = vmatprep.subr.mxu0 0.0
    %493 = vmatpush2.xpose.msra.mxu0 0.0
    %494 = vmatprep.subr.mxu0 0.0
    %495 = vmatpush2.xpose.msra.mxu0 0.0
    %496 = vmatprep.subr.mxu0 0.0
    %497 = vmatpush2.xpose.msra.mxu0 0.0
    %498 = vmatprep.subr.mxu0 0.0
    %499 = vmatpush2.xpose.msra.mxu0 0.0
    %500 = vmatprep.subr.mxu0 0.0
    %501 = vmatpush2.xpose.msra.mxu0 0.0
    %502 = vmatprep.mubr.f32.mxu0 0.0
    %503 = vmatmul.mubr.f32.gmra.mxu0 %v434
    %v504 = vpop.f32.mrf.mxu0
    %v505 = vadd.f32 0.0, %v504
    %v506 = vpop.f32.mrf.mxu0
    %507 = vdwg.mxu0
    %508 = vrot.lane.b32.xlu0 %v196, 96
    %v509 = vpop.permute.xlu0 %508
    %v510 = vsel %vm205, %v196, 0
    %v512 = vsel %vm205, %v509, 0
    %514 = vmatprep.subr.mxu0 0.0
    %515 = vmatpush1.xpose.msra.mxu0 0.0
    %516 = vmatprep.subr.mxu0 0.0
    %517 = vmatpush1.xpose.msra.mxu0 0.0
    %518 = vmatprep.subr.mxu0 0.0
    %519 = vmatpush1.xpose.msra.mxu0 0.0
    %520 = vmatprep.subr.mxu0 0.0
    %521 = vmatpush1.xpose.msra.mxu0 0.0
    %522 = vmatprep.subr.mxu0 0.0
    %523 = vmatpush1.xpose.msra.mxu0 0.0
    %524 = vmatprep.subr.mxu0 0.0
    %525 = vmatpush1.xpose.msra.mxu0 0.0
    %526 = vmatprep.subr.mxu0 0.0
    %527 = vmatpush1.xpose.msra.mxu0 0.0
    %528 = vmatprep.subr.mxu0 0.0
    %529 = vmatpush1.xpose.msra.mxu0 0.0
    %530 = vmatprep.subr.mxu0 0.0
    %531 = vmatpush1.xpose.msra.mxu0 0.0
    %532 = vmatprep.subr.mxu0 0.0
    %533 = vmatpush1.xpose.msra.mxu0 0.0
    %534 = vmatprep.subr.mxu0 0.0
    %535 = vmatpush1.xpose.msra.mxu0 0.0
    %536 = vmatprep.subr.mxu0 0.0
    %537 = vmatpush1.xpose.msra.mxu0 0.0
    %538 = vmatprep.subr.mxu0 0.0
    %539 = vmatpush1.xpose.msra.mxu0 0.0
    %540 = vmatprep.subr.mxu0 0.0
    %541 = vmatpush1.xpose.msra.mxu0 0.0
    %542 = vmatprep.subr.mxu0 0.0
    %543 = vmatpush1.xpose.msra.mxu0 0.0
    %544 = vmatprep.subr.mxu0 0.0
    %545 = vmatpush1.xpose.msra.mxu0 %v512
    %546 = vmatprep.subr.mxu0 0.0
    %547 = vmatpush2.xpose.msra.mxu0 0.0
    %548 = vmatprep.subr.mxu0 0.0
    %549 = vmatpush2.xpose.msra.mxu0 0.0
    %550 = vmatprep.subr.mxu0 0.0
    %551 = vmatpush2.xpose.msra.mxu0 0.0
    %552 = vmatprep.subr.mxu0 0.0
    %553 = vmatpush2.xpose.msra.mxu0 0.0
    %554 = vmatprep.subr.mxu0 0.0
    %555 = vmatpush2.xpose.msra.mxu0 0.0
    %556 = vmatprep.subr.mxu0 0.0
    %557 = vmatpush2.xpose.msra.mxu0 0.0
    %558 = vmatprep.subr.mxu0 0.0
    %559 = vmatpush2.xpose.msra.mxu0 0.0
    %560 = vmatprep.subr.mxu0 0.0
    %561 = vmatpush2.xpose.msra.mxu0 0.0
    %562 = vmatprep.subr.mxu0 0.0
    %563 = vmatpush2.xpose.msra.mxu0 0.0
    %564 = vmatprep.subr.mxu0 0.0
    %565 = vmatpush2.xpose.msra.mxu0 0.0
    %566 = vmatprep.subr.mxu0 0.0
    %567 = vmatpush2.xpose.msra.mxu0 0.0
    %568 = vmatprep.subr.mxu0 0.0
    %569 = vmatpush2.xpose.msra.mxu0 0.0
    %570 = vmatprep.subr.mxu0 0.0
    %571 = vmatpush2.xpose.msra.mxu0 0.0
    %572 = vmatprep.subr.mxu0 0.0
    %573 = vmatpush2.xpose.msra.mxu0 0.0
    %574 = vmatprep.subr.mxu0 0.0
    %575 = vmatpush2.xpose.msra.mxu0 0.0
    %576 = vmatprep.subr.mxu0 0.0
    %577 = vmatpush2.xpose.msra.mxu0 0.0
    %578 = vmatprep.mubr.f32.mxu0 0.0
    %579 = vmatmul.mubr.f32.gmra.mxu0 %v510
    %v580 = vpop.f32.mrf.mxu0
    %v581 = vadd.f32 0.0, %v580
    %v582 = vpop.f32.mrf.mxu0
    %583 = vdwg.mxu0
    %584 = vrot.lane.b32.xlu0 %v198, 96
    %v585 = vpop.permute.xlu0 %584
    %v586 = vsel %vm205, %v198, 0
    %v588 = vsel %vm205, %v585, 0
    %590 = vmatprep.subr.mxu0 0.0
    %591 = vmatpush1.xpose.msra.mxu0 0.0
    %592 = vmatprep.subr.mxu0 0.0
    %593 = vmatpush1.xpose.msra.mxu0 0.0
    %594 = vmatprep.subr.mxu0 0.0
    %595 = vmatpush1.xpose.msra.mxu0 0.0
    %596 = vmatprep.subr.mxu0 0.0
    %597 = vmatpush1.xpose.msra.mxu0 0.0
    %598 = vmatprep.subr.mxu0 0.0
    %599 = vmatpush1.xpose.msra.mxu0 0.0
    %600 = vmatprep.subr.mxu0 0.0
    %601 = vmatpush1.xpose.msra.mxu0 0.0
    %602 = vmatprep.subr.mxu0 0.0
    %603 = vmatpush1.xpose.msra.mxu0 0.0
    %604 = vmatprep.subr.mxu0 0.0
    %605 = vmatpush1.xpose.msra.mxu0 0.0
    %606 = vmatprep.subr.mxu0 0.0
    %607 = vmatpush1.xpose.msra.mxu0 0.0
    %608 = vmatprep.subr.mxu0 0.0
    %609 = vmatpush1.xpose.msra.mxu0 0.0
    %610 = vmatprep.subr.mxu0 0.0
    %611 = vmatpush1.xpose.msra.mxu0 0.0
    %612 = vmatprep.subr.mxu0 0.0
    %613 = vmatpush1.xpose.msra.mxu0 0.0
    %614 = vmatprep.subr.mxu0 0.0
    %615 = vmatpush1.xpose.msra.mxu0 0.0
    %616 = vmatprep.subr.mxu0 0.0
    %617 = vmatpush1.xpose.msra.mxu0 0.0
    %618 = vmatprep.subr.mxu0 0.0
    %619 = vmatpush1.xpose.msra.mxu0 0.0
    %620 = vmatprep.subr.mxu0 0.0
    %621 = vmatpush1.xpose.msra.mxu0 %v588
    %622 = vmatprep.subr.mxu0 0.0
    %623 = vmatpush2.xpose.msra.mxu0 0.0
    %624 = vmatprep.subr.mxu0 0.0
    %625 = vmatpush2.xpose.msra.mxu0 0.0
    %626 = vmatprep.subr.mxu0 0.0
    %627 = vmatpush2.xpose.msra.mxu0 0.0
    %628 = vmatprep.subr.mxu0 0.0
    %629 = vmatpush2.xpose.msra.mxu0 0.0
    %630 = vmatprep.subr.mxu0 0.0
    %631 = vmatpush2.xpose.msra.mxu0 0.0
    %632 = vmatprep.subr.mxu0 0.0
    %633 = vmatpush2.xpose.msra.mxu0 0.0
    %634 = vmatprep.subr.mxu0 0.0
    %635 = vmatpush2.xpose.msra.mxu0 0.0
    %636 = vmatprep.subr.mxu0 0.0
    %637 = vmatpush2.xpose.msra.mxu0 0.0
    %638 = vmatprep.subr.mxu0 0.0
    %639 = vmatpush2.xpose.msra.mxu0 0.0
    %640 = vmatprep.subr.mxu0 0.0
    %641 = vmatpush2.xpose.msra.mxu0 0.0
    %642 = vmatprep.subr.mxu0 0.0
    %643 = vmatpush2.xpose.msra.mxu0 0.0
    %644 = vmatprep.subr.mxu0 0.0
    %645 = vmatpush2.xpose.msra.mxu0 0.0
    %646 = vmatprep.subr.mxu0 0.0
    %647 = vmatpush2.xpose.msra.mxu0 0.0
    %648 = vmatprep.subr.mxu0 0.0
    %649 = vmatpush2.xpose.msra.mxu0 0.0
    %650 = vmatprep.subr.mxu0 0.0
    %651 = vmatpush2.xpose.msra.mxu0 0.0
    %652 = vmatprep.subr.mxu0 0.0
    %653 = vmatpush2.xpose.msra.mxu0 0.0
    %654 = vmatprep.mubr.f32.mxu0 0.0
    %655 = vmatmul.mubr.f32.gmra.mxu0 %v586
    %v656 = vpop.f32.mrf.mxu0
    %v657 = vadd.f32 0.0, %v656
    %v658 = vpop.f32.mrf.mxu0
    %659 = vdwg.mxu0
    %660 = vrot.lane.b32.xlu0 %v200, 96
    %v661 = vpop.permute.xlu0 %660
    %v662 = vsel %vm205, %v200, 0
    %v664 = vsel %vm205, %v661, 0
    %666 = vmatprep.subr.mxu0 0.0
    %667 = vmatpush1.xpose.msra.mxu0 0.0
    %668 = vmatprep.subr.mxu0 0.0
    %669 = vmatpush1.xpose.msra.mxu0 0.0
    %670 = vmatprep.subr.mxu0 0.0
    %671 = vmatpush1.xpose.msra.mxu0 0.0
    %672 = vmatprep.subr.mxu0 0.0
    %673 = vmatpush1.xpose.msra.mxu0 0.0
    %674 = vmatprep.subr.mxu0 0.0
    %675 = vmatpush1.xpose.msra.mxu0 0.0
    %676 = vmatprep.subr.mxu0 0.0
    %677 = vmatpush1.xpose.msra.mxu0 0.0
    %678 = vmatprep.subr.mxu0 0.0
    %679 = vmatpush1.xpose.msra.mxu0 0.0
    %680 = vmatprep.subr.mxu0 0.0
    %681 = vmatpush1.xpose.msra.mxu0 0.0
    %682 = vmatprep.subr.mxu0 0.0
    %683 = vmatpush1.xpose.msra.mxu0 0.0
    %684 = vmatprep.subr.mxu0 0.0
    %685 = vmatpush1.xpose.msra.mxu0 0.0
    %686 = vmatprep.subr.mxu0 0.0
    %687 = vmatpush1.xpose.msra.mxu0 0.0
    %688 = vmatprep.subr.mxu0 0.0
    %689 = vmatpush1.xpose.msra.mxu0 0.0
    %690 = vmatprep.subr.mxu0 0.0
    %691 = vmatpush1.xpose.msra.mxu0 0.0
    %692 = vmatprep.subr.mxu0 0.0
    %693 = vmatpush1.xpose.msra.mxu0 0.0
    %694 = vmatprep.subr.mxu0 0.0
    %695 = vmatpush1.xpose.msra.mxu0 0.0
    %696 = vmatprep.subr.mxu0 0.0
    %697 = vmatpush1.xpose.msra.mxu0 %v664
    %698 = vmatprep.subr.mxu0 0.0
    %699 = vmatpush2.xpose.msra.mxu0 0.0
    %700 = vmatprep.subr.mxu0 0.0
    %701 = vmatpush2.xpose.msra.mxu0 0.0
    %702 = vmatprep.subr.mxu0 0.0
    %703 = vmatpush2.xpose.msra.mxu0 0.0
    %704 = vmatprep.subr.mxu0 0.0
    %705 = vmatpush2.xpose.msra.mxu0 0.0
    %706 = vmatprep.subr.mxu0 0.0
    %707 = vmatpush2.xpose.msra.mxu0 0.0
    %708 = vmatprep.subr.mxu0 0.0
    %709 = vmatpush2.xpose.msra.mxu0 0.0
    %710 = vmatprep.subr.mxu0 0.0
    %711 = vmatpush2.xpose.msra.mxu0 0.0
    %712 = vmatprep.subr.mxu0 0.0
    %713 = vmatpush2.xpose.msra.mxu0 0.0
    %714 = vmatprep.subr.mxu0 0.0
    %715 = vmatpush2.xpose.msra.mxu0 0.0
    %716 = vmatprep.subr.mxu0 0.0
    %717 = vmatpush2.xpose.msra.mxu0 0.0
    %718 = vmatprep.subr.mxu0 0.0
    %719 = vmatpush2.xpose.msra.mxu0 0.0
    %720 = vmatprep.subr.mxu0 0.0
    %721 = vmatpush2.xpose.msra.mxu0 0.0
    %722 = vmatprep.subr.mxu0 0.0
    %723 = vmatpush2.xpose.msra.mxu0 0.0
    %724 = vmatprep.subr.mxu0 0.0
    %725 = vmatpush2.xpose.msra.mxu0 0.0
    %726 = vmatprep.subr.mxu0 0.0
    %727 = vmatpush2.xpose.msra.mxu0 0.0
    %728 = vmatprep.subr.mxu0 0.0
    %729 = vmatpush2.xpose.msra.mxu0 0.0
    %730 = vmatprep.mubr.f32.mxu0 0.0
    %731 = vmatmul.mubr.f32.gmra.mxu0 %v662
    %v732 = vpop.f32.mrf.mxu0
    %v733 = vadd.f32 0.0, %v732
    %v734 = vpop.f32.mrf.mxu0
    %735 = vdwg.mxu0
    %736 = vrot.lane.b32.xlu0 %v202, 96
    %v737 = vpop.permute.xlu0 %736
    %v738 = vsel %vm205, %v202, 0
    %v740 = vsel %vm205, %v737, 0
    %742 = vmatprep.subr.mxu0 0.0
    %743 = vmatpush1.xpose.msra.mxu0 0.0
    %744 = vmatprep.subr.mxu0 0.0
    %745 = vmatpush1.xpose.msra.mxu0 0.0
    %746 = vmatprep.subr.mxu0 0.0
    %747 = vmatpush1.xpose.msra.mxu0 0.0
    %748 = vmatprep.subr.mxu0 0.0
    %749 = vmatpush1.xpose.msra.mxu0 0.0
    %750 = vmatprep.subr.mxu0 0.0
    %751 = vmatpush1.xpose.msra.mxu0 0.0
    %752 = vmatprep.subr.mxu0 0.0
    %753 = vmatpush1.xpose.msra.mxu0 0.0
    %754 = vmatprep.subr.mxu0 0.0
    %755 = vmatpush1.xpose.msra.mxu0 0.0
    %756 = vmatprep.subr.mxu0 0.0
    %757 = vmatpush1.xpose.msra.mxu0 0.0
    %758 = vmatprep.subr.mxu0 0.0
    %759 = vmatpush1.xpose.msra.mxu0 0.0
    %760 = vmatprep.subr.mxu0 0.0
    %761 = vmatpush1.xpose.msra.mxu0 0.0
    %762 = vmatprep.subr.mxu0 0.0
    %763 = vmatpush1.xpose.msra.mxu0 0.0
    %764 = vmatprep.subr.mxu0 0.0
    %765 = vmatpush1.xpose.msra.mxu0 0.0
    %766 = vmatprep.subr.mxu0 0.0
    %767 = vmatpush1.xpose.msra.mxu0 0.0
    %768 = vmatprep.subr.mxu0 0.0
    %769 = vmatpush1.xpose.msra.mxu0 0.0
    %770 = vmatprep.subr.mxu0 0.0
    %771 = vmatpush1.xpose.msra.mxu0 0.0
    %772 = vmatprep.subr.mxu0 0.0
    %773 = vmatpush1.xpose.msra.mxu0 %v740
    %774 = vmatprep.subr.mxu0 0.0
    %775 = vmatpush2.xpose.msra.mxu0 0.0
    %776 = vmatprep.subr.mxu0 0.0
    %777 = vmatpush2.xpose.msra.mxu0 0.0
    %778 = vmatprep.subr.mxu0 0.0
    %779 = vmatpush2.xpose.msra.mxu0 0.0
    %780 = vmatprep.subr.mxu0 0.0
    %781 = vmatpush2.xpose.msra.mxu0 0.0
    %782 = vmatprep.subr.mxu0 0.0
    %783 = vmatpush2.xpose.msra.mxu0 0.0
    %784 = vmatprep.subr.mxu0 0.0
    %785 = vmatpush2.xpose.msra.mxu0 0.0
    %786 = vmatprep.subr.mxu0 0.0
    %787 = vmatpush2.xpose.msra.mxu0 0.0
    %788 = vmatprep.subr.mxu0 0.0
    %789 = vmatpush2.xpose.msra.mxu0 0.0
    %790 = vmatprep.subr.mxu0 0.0
    %791 = vmatpush2.xpose.msra.mxu0 0.0
    %792 = vmatprep.subr.mxu0 0.0
    %793 = vmatpush2.xpose.msra.mxu0 0.0
    %794 = vmatprep.subr.mxu0 0.0
    %795 = vmatpush2.xpose.msra.mxu0 0.0
    %796 = vmatprep.subr.mxu0 0.0
    %797 = vmatpush2.xpose.msra.mxu0 0.0
    %798 = vmatprep.subr.mxu0 0.0
    %799 = vmatpush2.xpose.msra.mxu0 0.0
    %800 = vmatprep.subr.mxu0 0.0
    %801 = vmatpush2.xpose.msra.mxu0 0.0
    %802 = vmatprep.subr.mxu0 0.0
    %803 = vmatpush2.xpose.msra.mxu0 0.0
    %804 = vmatprep.subr.mxu0 0.0
    %805 = vmatpush2.xpose.msra.mxu0 0.0
    %806 = vmatprep.mubr.f32.mxu0 0.0
    %807 = vmatmul.mubr.f32.gmra.mxu0 %v738
    %v808 = vpop.f32.mrf.mxu0
    %v809 = vadd.f32 0.0, %v808
    %v810 = vpop.f32.mrf.mxu0
    %811 = vdwg.mxu0
    %v812 = vmul.f32 %v277, 0.35355338
    %v813 = vmul.f32 %v353, 0.35355338
    %v814 = vmul.f32 %v429, 0.35355338
    %v815 = vmul.f32 %v505, 0.35355338
    %v816 = vmul.f32 %v581, 0.35355338
    %v817 = vmul.f32 %v657, 0.35355338
    %v818 = vmul.f32 %v733, 0.35355338
    %v819 = vmul.f32 %v809, 0.35355338
    %v820 = vlaneseq
    %v821 = vshrl.u32 %v820, 7
    %v822 = vlaneseq
    %v823 = vand.u32 %v822, 127
    %vm824 = vcmp.gt.s32.totalorder %v823, %v821
    %v825 = vsel %vm824, 1, 0
    %vm826 = vcmp.eq.s32.totalorder %v825, 1
    %v827 = vsel %vm826, -1e+30, %v812
    %v828 = vsel %vm826, -1e+30, %v813
    %v829 = vsel %vm826, -1e+30, %v814
    %v830 = vsel %vm826, -1e+30, %v815
    %v831 = vsel %vm826, -1e+30, %v816
    %v832 = vsel %vm826, -1e+30, %v817
    %v833 = vsel %vm826, -1e+30, %v818
    %v834 = vsel %vm826, -1e+30, %v819
    %v835 = vsel %vm205, %v827, -inf
    %836 = vmax.xlane.f32.xlu0 %v835
    %v837 = vpop.xlane.xlu0 %836
    %v838 = vsel %vm205, %v828, -inf
    %839 = vmax.xlane.f32.xlu0 %v838
    %v840 = vpop.xlane.xlu0 %839
    %v841 = vsel %vm205, %v829, -inf
    %842 = vmax.xlane.f32.xlu0 %v841
    %v843 = vpop.xlane.xlu0 %842
    %v844 = vsel %vm205, %v830, -inf
    %845 = vmax.xlane.f32.xlu0 %v844
    %v846 = vpop.xlane.xlu0 %845
    %v847 = vsel %vm205, %v831, -inf
    %848 = vmax.xlane.f32.xlu0 %v847
    %v849 = vpop.xlane.xlu0 %848
    %v850 = vsel %vm205, %v832, -inf
    %851 = vmax.xlane.f32.xlu0 %v850
    %v852 = vpop.xlane.xlu0 %851
    %v853 = vsel %vm205, %v833, -inf
    %854 = vmax.xlane.f32.xlu0 %v853
    %v855 = vpop.xlane.xlu0 %854
    %v856 = vsel %vm205, %v834, -inf
    %857 = vmax.xlane.f32.xlu0 %v856
    %v858 = vpop.xlane.xlu0 %857
    %v859 = vsub.f32 %v827, %v837
    %v860 = vsub.f32 %v828, %v840
    %v861 = vsub.f32 %v829, %v843
    %v862 = vsub.f32 %v830, %v846
    %v863 = vsub.f32 %v831, %v849
    %v864 = vsub.f32 %v832, %v852
    %v865 = vsub.f32 %v833, %v855
    %v866 = vsub.f32 %v834, %v858
    %v867 = vmul.f32 %v859, 1.442695
    %v868 = vpow.pop %v867
    %v869 = vmul.f32 %v860, 1.442695
    %v870 = vpow.pop %v869
    %v871 = vmul.f32 %v861, 1.442695
    %v872 = vpow.pop %v871
    %v873 = vmul.f32 %v862, 1.442695
    %v874 = vpow.pop %v873
    %v875 = vmul.f32 %v863, 1.442695
    %v876 = vpow.pop %v875
    %v877 = vmul.f32 %v864, 1.442695
    %v878 = vpow.pop %v877
    %v879 = vmul.f32 %v865, 1.442695
    %v880 = vpow.pop %v879
    %v881 = vmul.f32 %v866, 1.442695
    %v882 = vpow.pop %v881
    %v883 = vsel %vm205, %v868, 0.0
    %884 = vadd.xlane.f32.xlu0 %v883
    %v885 = vpop.xlane.xlu0 %884
    %v886 = vsel %vm205, %v870, 0.0
    %887 = vadd.xlane.f32.xlu0 %v886
    %v888 = vpop.xlane.xlu0 %887
    %v889 = vsel %vm205, %v872, 0.0
    %890 = vadd.xlane.f32.xlu0 %v889
    %v891 = vpop.xlane.xlu0 %890
    %v892 = vsel %vm205, %v874, 0.0
    %893 = vadd.xlane.f32.xlu0 %v892
    %v894 = vpop.xlane.xlu0 %893
    %v895 = vsel %vm205, %v876, 0.0
    %896 = vadd.xlane.f32.xlu0 %v895
    %v897 = vpop.xlane.xlu0 %896
    %v898 = vsel %vm205, %v878, 0.0
    %899 = vadd.xlane.f32.xlu0 %v898
    %v900 = vpop.xlane.xlu0 %899
    %v901 = vsel %vm205, %v880, 0.0
    %902 = vadd.xlane.f32.xlu0 %v901
    %v903 = vpop.xlane.xlu0 %902
    %v904 = vsel %vm205, %v882, 0.0
    %905 = vadd.xlane.f32.xlu0 %v904
    %v906 = vpop.xlane.xlu0 %905
    %v907 = vrcp.pop %v885
    %v908 = vrcp.pop %v888
    %v909 = vrcp.pop %v891
    %v910 = vrcp.pop %v894
    %v911 = vrcp.pop %v897
    %v912 = vrcp.pop %v900
    %v913 = vrcp.pop %v903
    %v914 = vrcp.pop %v906
    %v915 = vmul.f32 %v868, %v907
    %v916 = vmul.f32 %v870, %v908
    %v917 = vmul.f32 %v872, %v909
    %v918 = vmul.f32 %v874, %v910
    %v919 = vmul.f32 %v876, %v911
    %v920 = vmul.f32 %v878, %v912
    %v921 = vmul.f32 %v880, %v913
    %v922 = vmul.f32 %v882, %v914
    %923 = vrot.lane.b32.xlu0 %v181, 64
    %v924 = vpop.permute.xlu0 %923
    %v927 = vsel %vm205, %v915, 0
    %929 = vmatprep.subr.mxu0 0.0
    %930 = vmatpush1.msra.mxu0 0.0
    %931 = vmatprep.subr.mxu0 0.0
    %932 = vmatpush1.msra.mxu0 0.0
    %933 = vmatprep.subr.mxu0 0.0
    %934 = vmatpush1.msra.mxu0 0.0
    %935 = vmatprep.subr.mxu0 0.0
    %936 = vmatpush1.msra.mxu0 0.0
    %937 = vmatprep.subr.mxu0 0.0
    %938 = vmatpush1.msra.mxu0 0.0
    %939 = vmatprep.subr.mxu0 0.0
    %940 = vmatpush1.msra.mxu0 0.0
    %941 = vmatprep.subr.mxu0 0.0
    %942 = vmatpush1.msra.mxu0 0.0
    %943 = vmatprep.subr.mxu0 0.0
    %944 = vmatpush1.msra.mxu0 0.0
    %945 = vmatprep.subr.mxu0 0.0
    %946 = vmatpush1.msra.mxu0 0.0
    %947 = vmatprep.subr.mxu0 0.0
    %948 = vmatpush1.msra.mxu0 0.0
    %949 = vmatprep.subr.mxu0 0.0
    %950 = vmatpush1.msra.mxu0 0.0
    %951 = vmatprep.subr.mxu0 0.0
    %952 = vmatpush1.msra.mxu0 0.0
    %953 = vmatprep.subr.mxu0 0.0
    %954 = vmatpush1.msra.mxu0 0.0
    %955 = vmatprep.subr.mxu0 0.0
    %956 = vmatpush1.msra.mxu0 0.0
    %957 = vmatprep.subr.mxu0 0.0
    %958 = vmatpush1.msra.mxu0 0.0
    %959 = vmatprep.subr.mxu0 0.0
    %960 = vmatpush1.msra.mxu0 %v924
    %961 = vmatprep.subr.mxu0 0.0
    %962 = vmatpush2.msra.mxu0 0.0
    %963 = vmatprep.subr.mxu0 0.0
    %964 = vmatpush2.msra.mxu0 0.0
    %965 = vmatprep.subr.mxu0 0.0
    %966 = vmatpush2.msra.mxu0 0.0
    %967 = vmatprep.subr.mxu0 0.0
    %968 = vmatpush2.msra.mxu0 0.0
    %969 = vmatprep.subr.mxu0 0.0
    %970 = vmatpush2.msra.mxu0 0.0
    %971 = vmatprep.subr.mxu0 0.0
    %972 = vmatpush2.msra.mxu0 0.0
    %973 = vmatprep.subr.mxu0 0.0
    %974 = vmatpush2.msra.mxu0 0.0
    %975 = vmatprep.subr.mxu0 0.0
    %976 = vmatpush2.msra.mxu0 0.0
    %977 = vmatprep.subr.mxu0 0.0
    %978 = vmatpush2.msra.mxu0 0.0
    %979 = vmatprep.subr.mxu0 0.0
    %980 = vmatpush2.msra.mxu0 0.0
    %981 = vmatprep.subr.mxu0 0.0
    %982 = vmatpush2.msra.mxu0 0.0
    %983 = vmatprep.subr.mxu0 0.0
    %984 = vmatpush2.msra.mxu0 0.0
    %985 = vmatprep.subr.mxu0 0.0
    %986 = vmatpush2.msra.mxu0 0.0
    %987 = vmatprep.subr.mxu0 0.0
    %988 = vmatpush2.msra.mxu0 0.0
    %989 = vmatprep.subr.mxu0 0.0
    %990 = vmatpush2.msra.mxu0 0.0
    %991 = vmatprep.subr.mxu0 0.0
    %992 = vmatpush2.msra.mxu0 0.0
    %993 = vmatprep.mubr.f32.mxu0 0.0
    %994 = vmatmul.mubr.f32.gmra.mxu0 %v927
    %v995 = vpop.f32.mrf.mxu0
    %v996 = vadd.f32 0.0, %v995
    %v997 = vpop.f32.mrf.mxu0
    %998 = vdwg.mxu0
    %999 = vrot.lane.b32.xlu0 %v186, 64
    %v1000 = vpop.permute.xlu0 %999
    %v1003 = vsel %vm205, %v916, 0
    %1005 = vmatprep.subr.mxu0 0.0
    %1006 = vmatpush1.msra.mxu0 0.0
    %1007 = vmatprep.subr.mxu0 0.0
    %1008 = vmatpush1.msra.mxu0 0.0
    %1009 = vmatprep.subr.mxu0 0.0
    %1010 = vmatpush1.msra.mxu0 0.0
    %1011 = vmatprep.subr.mxu0 0.0
    %1012 = vmatpush1.msra.mxu0 0.0
    %1013 = vmatprep.subr.mxu0 0.0
    %1014 = vmatpush1.msra.mxu0 0.0
    %1015 = vmatprep.subr.mxu0 0.0
    %1016 = vmatpush1.msra.mxu0 0.0
    %1017 = vmatprep.subr.mxu0 0.0
    %1018 = vmatpush1.msra.mxu0 0.0
    %1019 = vmatprep.subr.mxu0 0.0
    %1020 = vmatpush1.msra.mxu0 0.0
    %1021 = vmatprep.subr.mxu0 0.0
    %1022 = vmatpush1.msra.mxu0 0.0
    %1023 = vmatprep.subr.mxu0 0.0
    %1024 = vmatpush1.msra.mxu0 0.0
    %1025 = vmatprep.subr.mxu0 0.0
    %1026 = vmatpush1.msra.mxu0 0.0
    %1027 = vmatprep.subr.mxu0 0.0
    %1028 = vmatpush1.msra.mxu0 0.0
    %1029 = vmatprep.subr.mxu0 0.0
    %1030 = vmatpush1.msra.mxu0 0.0
    %1031 = vmatprep.subr.mxu0 0.0
    %1032 = vmatpush1.msra.mxu0 0.0
    %1033 = vmatprep.subr.mxu0 0.0
    %1034 = vmatpush1.msra.mxu0 0.0
    %1035 = vmatprep.subr.mxu0 0.0
    %1036 = vmatpush1.msra.mxu0 %v1000
    %1037 = vmatprep.subr.mxu0 0.0
    %1038 = vmatpush2.msra.mxu0 0.0
    %1039 = vmatprep.subr.mxu0 0.0
    %1040 = vmatpush2.msra.mxu0 0.0
    %1041 = vmatprep.subr.mxu0 0.0
    %1042 = vmatpush2.msra.mxu0 0.0
    %1043 = vmatprep.subr.mxu0 0.0
    %1044 = vmatpush2.msra.mxu0 0.0
    %1045 = vmatprep.subr.mxu0 0.0
    %1046 = vmatpush2.msra.mxu0 0.0
    %1047 = vmatprep.subr.mxu0 0.0
    %1048 = vmatpush2.msra.mxu0 0.0
    %1049 = vmatprep.subr.mxu0 0.0
    %1050 = vmatpush2.msra.mxu0 0.0
    %1051 = vmatprep.subr.mxu0 0.0
    %1052 = vmatpush2.msra.mxu0 0.0
    %1053 = vmatprep.subr.mxu0 0.0
    %1054 = vmatpush2.msra.mxu0 0.0
    %1055 = vmatprep.subr.mxu0 0.0
    %1056 = vmatpush2.msra.mxu0 0.0
    %1057 = vmatprep.subr.mxu0 0.0
    %1058 = vmatpush2.msra.mxu0 0.0
    %1059 = vmatprep.subr.mxu0 0.0
    %1060 = vmatpush2.msra.mxu0 0.0
    %1061 = vmatprep.subr.mxu0 0.0
    %1062 = vmatpush2.msra.mxu0 0.0
    %1063 = vmatprep.subr.mxu0 0.0
    %1064 = vmatpush2.msra.mxu0 0.0
    %1065 = vmatprep.subr.mxu0 0.0
    %1066 = vmatpush2.msra.mxu0 0.0
    %1067 = vmatprep.subr.mxu0 0.0
    %1068 = vmatpush2.msra.mxu0 0.0
    %1069 = vmatprep.mubr.f32.mxu0 0.0
    %1070 = vmatmul.mubr.f32.gmra.mxu0 %v1003
    %v1071 = vpop.f32.mrf.mxu0
    %v1072 = vadd.f32 0.0, %v1071
    %v1073 = vpop.f32.mrf.mxu0
    %1074 = vdwg.mxu0
    %1075 = vrot.lane.b32.xlu0 %v192, 64
    %v1076 = vpop.permute.xlu0 %1075
    %v1079 = vsel %vm205, %v917, 0
    %1081 = vmatprep.subr.mxu0 0.0
    %1082 = vmatpush1.msra.mxu0 0.0
    %1083 = vmatprep.subr.mxu0 0.0
    %1084 = vmatpush1.msra.mxu0 0.0
    %1085 = vmatprep.subr.mxu0 0.0
    %1086 = vmatpush1.msra.mxu0 0.0
    %1087 = vmatprep.subr.mxu0 0.0
    %1088 = vmatpush1.msra.mxu0 0.0
    %1089 = vmatprep.subr.mxu0 0.0
    %1090 = vmatpush1.msra.mxu0 0.0
    %1091 = vmatprep.subr.mxu0 0.0
    %1092 = vmatpush1.msra.mxu0 0.0
    %1093 = vmatprep.subr.mxu0 0.0
    %1094 = vmatpush1.msra.mxu0 0.0
    %1095 = vmatprep.subr.mxu0 0.0
    %1096 = vmatpush1.msra.mxu0 0.0
    %1097 = vmatprep.subr.mxu0 0.0
    %1098 = vmatpush1.msra.mxu0 0.0
    %1099 = vmatprep.subr.mxu0 0.0
    %1100 = vmatpush1.msra.mxu0 0.0
    %1101 = vmatprep.subr.mxu0 0.0
    %1102 = vmatpush1.msra.mxu0 0.0
    %1103 = vmatprep.subr.mxu0 0.0
    %1104 = vmatpush1.msra.mxu0 0.0
    %1105 = vmatprep.subr.mxu0 0.0
    %1106 = vmatpush1.msra.mxu0 0.0
    %1107 = vmatprep.subr.mxu0 0.0
    %1108 = vmatpush1.msra.mxu0 0.0
    %1109 = vmatprep.subr.mxu0 0.0
    %1110 = vmatpush1.msra.mxu0 0.0
    %1111 = vmatprep.subr.mxu0 0.0
    %1112 = vmatpush1.msra.mxu0 %v1076
    %1113 = vmatprep.subr.mxu0 0.0
    %1114 = vmatpush2.msra.mxu0 0.0
    %1115 = vmatprep.subr.mxu0 0.0
    %1116 = vmatpush2.msra.mxu0 0.0
    %1117 = vmatprep.subr.mxu0 0.0
    %1118 = vmatpush2.msra.mxu0 0.0
    %1119 = vmatprep.subr.mxu0 0.0
    %1120 = vmatpush2.msra.mxu0 0.0
    %1121 = vmatprep.subr.mxu0 0.0
    %1122 = vmatpush2.msra.mxu0 0.0
    %1123 = vmatprep.subr.mxu0 0.0
    %1124 = vmatpush2.msra.mxu0 0.0
    %1125 = vmatprep.subr.mxu0 0.0
    %1126 = vmatpush2.msra.mxu0 0.0
    %1127 = vmatprep.subr.mxu0 0.0
    %1128 = vmatpush2.msra.mxu0 0.0
    %1129 = vmatprep.subr.mxu0 0.0
    %1130 = vmatpush2.msra.mxu0 0.0
    %1131 = vmatprep.subr.mxu0 0.0
    %1132 = vmatpush2.msra.mxu0 0.0
    %1133 = vmatprep.subr.mxu0 0.0
    %1134 = vmatpush2.msra.mxu0 0.0
    %1135 = vmatprep.subr.mxu0 0.0
    %1136 = vmatpush2.msra.mxu0 0.0
    %1137 = vmatprep.subr.mxu0 0.0
    %1138 = vmatpush2.msra.mxu0 0.0
    %1139 = vmatprep.subr.mxu0 0.0
    %1140 = vmatpush2.msra.mxu0 0.0
    %1141 = vmatprep.subr.mxu0 0.0
    %1142 = vmatpush2.msra.mxu0 0.0
    %1143 = vmatprep.subr.mxu0 0.0
    %1144 = vmatpush2.msra.mxu0 0.0
    %1145 = vmatprep.mubr.f32.mxu0 0.0
    %1146 = vmatmul.mubr.f32.gmra.mxu0 %v1079
    %v1147 = vpop.f32.mrf.mxu0
    %v1148 = vadd.f32 0.0, %v1147
    %v1149 = vpop.f32.mrf.mxu0
    %1150 = vdwg.mxu0
    %1151 = vrot.lane.b32.xlu0 %v194, 64
    %v1152 = vpop.permute.xlu0 %1151
    %v1155 = vsel %vm205, %v918, 0
    %1157 = vmatprep.subr.mxu0 0.0
    %1158 = vmatpush1.msra.mxu0 0.0
    %1159 = vmatprep.subr.mxu0 0.0
    %1160 = vmatpush1.msra.mxu0 0.0
    %1161 = vmatprep.subr.mxu0 0.0
    %1162 = vmatpush1.msra.mxu0 0.0
    %1163 = vmatprep.subr.mxu0 0.0
    %1164 = vmatpush1.msra.mxu0 0.0
    %1165 = vmatprep.subr.mxu0 0.0
    %1166 = vmatpush1.msra.mxu0 0.0
    %1167 = vmatprep.subr.mxu0 0.0
    %1168 = vmatpush1.msra.mxu0 0.0
    %1169 = vmatprep.subr.mxu0 0.0
    %1170 = vmatpush1.msra.mxu0 0.0
    %1171 = vmatprep.subr.mxu0 0.0
    %1172 = vmatpush1.msra.mxu0 0.0
    %1173 = vmatprep.subr.mxu0 0.0
    %1174 = vmatpush1.msra.mxu0 0.0
    %1175 = vmatprep.subr.mxu0 0.0
    %1176 = vmatpush1.msra.mxu0 0.0
    %1177 = vmatprep.subr.mxu0 0.0
    %1178 = vmatpush1.msra.mxu0 0.0
    %1179 = vmatprep.subr.mxu0 0.0
    %1180 = vmatpush1.msra.mxu0 0.0
    %1181 = vmatprep.subr.mxu0 0.0
    %1182 = vmatpush1.msra.mxu0 0.0
    %1183 = vmatprep.subr.mxu0 0.0
    %1184 = vmatpush1.msra.mxu0 0.0
    %1185 = vmatprep.subr.mxu0 0.0
    %1186 = vmatpush1.msra.mxu0 0.0
    %1187 = vmatprep.subr.mxu0 0.0
    %1188 = vmatpush1.msra.mxu0 %v1152
    %1189 = vmatprep.subr.mxu0 0.0
    %1190 = vmatpush2.msra.mxu0 0.0
    %1191 = vmatprep.subr.mxu0 0.0
    %1192 = vmatpush2.msra.mxu0 0.0
    %1193 = vmatprep.subr.mxu0 0.0
    %1194 = vmatpush2.msra.mxu0 0.0
    %1195 = vmatprep.subr.mxu0 0.0
    %1196 = vmatpush2.msra.mxu0 0.0
    %1197 = vmatprep.subr.mxu0 0.0
    %1198 = vmatpush2.msra.mxu0 0.0
    %1199 = vmatprep.subr.mxu0 0.0
    %1200 = vmatpush2.msra.mxu0 0.0
    %1201 = vmatprep.subr.mxu0 0.0
    %1202 = vmatpush2.msra.mxu0 0.0
    %1203 = vmatprep.subr.mxu0 0.0
    %1204 = vmatpush2.msra.mxu0 0.0
    %1205 = vmatprep.subr.mxu0 0.0
    %1206 = vmatpush2.msra.mxu0 0.0
    %1207 = vmatprep.subr.mxu0 0.0
    %1208 = vmatpush2.msra.mxu0 0.0
    %1209 = vmatprep.subr.mxu0 0.0
    %1210 = vmatpush2.msra.mxu0 0.0
    %1211 = vmatprep.subr.mxu0 0.0
    %1212 = vmatpush2.msra.mxu0 0.0
    %1213 = vmatprep.subr.mxu0 0.0
    %1214 = vmatpush2.msra.mxu0 0.0
    %1215 = vmatprep.subr.mxu0 0.0
    %1216 = vmatpush2.msra.mxu0 0.0
    %1217 = vmatprep.subr.mxu0 0.0
    %1218 = vmatpush2.msra.mxu0 0.0
    %1219 = vmatprep.subr.mxu0 0.0
    %1220 = vmatpush2.msra.mxu0 0.0
    %1221 = vmatprep.mubr.f32.mxu0 0.0
    %1222 = vmatmul.mubr.f32.gmra.mxu0 %v1155
    %v1223 = vpop.f32.mrf.mxu0
    %v1224 = vadd.f32 0.0, %v1223
    %v1225 = vpop.f32.mrf.mxu0
    %1226 = vdwg.mxu0
    %1227 = vrot.lane.b32.xlu0 %v196, 64
    %v1228 = vpop.permute.xlu0 %1227
    %v1231 = vsel %vm205, %v919, 0
    %1233 = vmatprep.subr.mxu0 0.0
    %1234 = vmatpush1.msra.mxu0 0.0
    %1235 = vmatprep.subr.mxu0 0.0
    %1236 = vmatpush1.msra.mxu0 0.0
    %1237 = vmatprep.subr.mxu0 0.0
    %1238 = vmatpush1.msra.mxu0 0.0
    %1239 = vmatprep.subr.mxu0 0.0
    %1240 = vmatpush1.msra.mxu0 0.0
    %1241 = vmatprep.subr.mxu0 0.0
    %1242 = vmatpush1.msra.mxu0 0.0
    %1243 = vmatprep.subr.mxu0 0.0
    %1244 = vmatpush1.msra.mxu0 0.0
    %1245 = vmatprep.subr.mxu0 0.0
    %1246 = vmatpush1.msra.mxu0 0.0
    %1247 = vmatprep.subr.mxu0 0.0
    %1248 = vmatpush1.msra.mxu0 0.0
    %1249 = vmatprep.subr.mxu0 0.0
    %1250 = vmatpush1.msra.mxu0 0.0
    %1251 = vmatprep.subr.mxu0 0.0
    %1252 = vmatpush1.msra.mxu0 0.0
    %1253 = vmatprep.subr.mxu0 0.0
    %1254 = vmatpush1.msra.mxu0 0.0
    %1255 = vmatprep.subr.mxu0 0.0
    %1256 = vmatpush1.msra.mxu0 0.0
    %1257 = vmatprep.subr.mxu0 0.0
    %1258 = vmatpush1.msra.mxu0 0.0
    %1259 = vmatprep.subr.mxu0 0.0
    %1260 = vmatpush1.msra.mxu0 0.0
    %1261 = vmatprep.subr.mxu0 0.0
    %1262 = vmatpush1.msra.mxu0 0.0
    %1263 = vmatprep.subr.mxu0 0.0
    %1264 = vmatpush1.msra.mxu0 %v1228
    %1265 = vmatprep.subr.mxu0 0.0
    %1266 = vmatpush2.msra.mxu0 0.0
    %1267 = vmatprep.subr.mxu0 0.0
    %1268 = vmatpush2.msra.mxu0 0.0
    %1269 = vmatprep.subr.mxu0 0.0
    %1270 = vmatpush2.msra.mxu0 0.0
    %1271 = vmatprep.subr.mxu0 0.0
    %1272 = vmatpush2.msra.mxu0 0.0
    %1273 = vmatprep.subr.mxu0 0.0
    %1274 = vmatpush2.msra.mxu0 0.0
    %1275 = vmatprep.subr.mxu0 0.0
    %1276 = vmatpush2.msra.mxu0 0.0
    %1277 = vmatprep.subr.mxu0 0.0
    %1278 = vmatpush2.msra.mxu0 0.0
    %1279 = vmatprep.subr.mxu0 0.0
    %1280 = vmatpush2.msra.mxu0 0.0
    %1281 = vmatprep.subr.mxu0 0.0
    %1282 = vmatpush2.msra.mxu0 0.0
    %1283 = vmatprep.subr.mxu0 0.0
    %1284 = vmatpush2.msra.mxu0 0.0
    %1285 = vmatprep.subr.mxu0 0.0
    %1286 = vmatpush2.msra.mxu0 0.0
    %1287 = vmatprep.subr.mxu0 0.0
    %1288 = vmatpush2.msra.mxu0 0.0
    %1289 = vmatprep.subr.mxu0 0.0
    %1290 = vmatpush2.msra.mxu0 0.0
    %1291 = vmatprep.subr.mxu0 0.0
    %1292 = vmatpush2.msra.mxu0 0.0
    %1293 = vmatprep.subr.mxu0 0.0
    %1294 = vmatpush2.msra.mxu0 0.0
    %1295 = vmatprep.subr.mxu0 0.0
    %1296 = vmatpush2.msra.mxu0 0.0
    %1297 = vmatprep.mubr.f32.mxu0 0.0
    %1298 = vmatmul.mubr.f32.gmra.mxu0 %v1231
    %v1299 = vpop.f32.mrf.mxu0
    %v1300 = vadd.f32 0.0, %v1299
    %v1301 = vpop.f32.mrf.mxu0
    %1302 = vdwg.mxu0
    %1303 = vrot.lane.b32.xlu0 %v198, 64
    %v1304 = vpop.permute.xlu0 %1303
    %v1307 = vsel %vm205, %v920, 0
    %1309 = vmatprep.subr.mxu0 0.0
    %1310 = vmatpush1.msra.mxu0 0.0
    %1311 = vmatprep.subr.mxu0 0.0
    %1312 = vmatpush1.msra.mxu0 0.0
    %1313 = vmatprep.subr.mxu0 0.0
    %1314 = vmatpush1.msra.mxu0 0.0
    %1315 = vmatprep.subr.mxu0 0.0
    %1316 = vmatpush1.msra.mxu0 0.0
    %1317 = vmatprep.subr.mxu0 0.0
    %1318 = vmatpush1.msra.mxu0 0.0
    %1319 = vmatprep.subr.mxu0 0.0
    %1320 = vmatpush1.msra.mxu0 0.0
    %1321 = vmatprep.subr.mxu0 0.0
    %1322 = vmatpush1.msra.mxu0 0.0
    %1323 = vmatprep.subr.mxu0 0.0
    %1324 = vmatpush1.msra.mxu0 0.0
    %1325 = vmatprep.subr.mxu0 0.0
    %1326 = vmatpush1.msra.mxu0 0.0
    %1327 = vmatprep.subr.mxu0 0.0
    %1328 = vmatpush1.msra.mxu0 0.0
    %1329 = vmatprep.subr.mxu0 0.0
    %1330 = vmatpush1.msra.mxu0 0.0
    %1331 = vmatprep.subr.mxu0 0.0
    %1332 = vmatpush1.msra.mxu0 0.0
    %1333 = vmatprep.subr.mxu0 0.0
    %1334 = vmatpush1.msra.mxu0 0.0
    %1335 = vmatprep.subr.mxu0 0.0
    %1336 = vmatpush1.msra.mxu0 0.0
    %1337 = vmatprep.subr.mxu0 0.0
    %1338 = vmatpush1.msra.mxu0 0.0
    %1339 = vmatprep.subr.mxu0 0.0
    %1340 = vmatpush1.msra.mxu0 %v1304
    %1341 = vmatprep.subr.mxu0 0.0
    %1342 = vmatpush2.msra.mxu0 0.0
    %1343 = vmatprep.subr.mxu0 0.0
    %1344 = vmatpush2.msra.mxu0 0.0
    %1345 = vmatprep.subr.mxu0 0.0
    %1346 = vmatpush2.msra.mxu0 0.0
    %1347 = vmatprep.subr.mxu0 0.0
    %1348 = vmatpush2.msra.mxu0 0.0
    %1349 = vmatprep.subr.mxu0 0.0
    %1350 = vmatpush2.msra.mxu0 0.0
    %1351 = vmatprep.subr.mxu0 0.0
    %1352 = vmatpush2.msra.mxu0 0.0
    %1353 = vmatprep.subr.mxu0 0.0
    %1354 = vmatpush2.msra.mxu0 0.0
    %1355 = vmatprep.subr.mxu0 0.0
    %1356 = vmatpush2.msra.mxu0 0.0
    %1357 = vmatprep.subr.mxu0 0.0
    %1358 = vmatpush2.msra.mxu0 0.0
    %1359 = vmatprep.subr.mxu0 0.0
    %1360 = vmatpush2.msra.mxu0 0.0
    %1361 = vmatprep.subr.mxu0 0.0
    %1362 = vmatpush2.msra.mxu0 0.0
    %1363 = vmatprep.subr.mxu0 0.0
    %1364 = vmatpush2.msra.mxu0 0.0
    %1365 = vmatprep.subr.mxu0 0.0
    %1366 = vmatpush2.msra.mxu0 0.0
    %1367 = vmatprep.subr.mxu0 0.0
    %1368 = vmatpush2.msra.mxu0 0.0
    %1369 = vmatprep.subr.mxu0 0.0
    %1370 = vmatpush2.msra.mxu0 0.0
    %1371 = vmatprep.subr.mxu0 0.0
    %1372 = vmatpush2.msra.mxu0 0.0
    %1373 = vmatprep.mubr.f32.mxu0 0.0
    %1374 = vmatmul.mubr.f32.gmra.mxu0 %v1307
    %v1375 = vpop.f32.mrf.mxu0
    %v1376 = vadd.f32 0.0, %v1375
    %v1377 = vpop.f32.mrf.mxu0
    %1378 = vdwg.mxu0
    %1379 = vrot.lane.b32.xlu0 %v200, 64
    %v1380 = vpop.permute.xlu0 %1379
    %v1383 = vsel %vm205, %v921, 0
    %1385 = vmatprep.subr.mxu0 0.0
    %1386 = vmatpush1.msra.mxu0 0.0
    %1387 = vmatprep.subr.mxu0 0.0
    %1388 = vmatpush1.msra.mxu0 0.0
    %1389 = vmatprep.subr.mxu0 0.0
    %1390 = vmatpush1.msra.mxu0 0.0
    %1391 = vmatprep.subr.mxu0 0.0
    %1392 = vmatpush1.msra.mxu0 0.0
    %1393 = vmatprep.subr.mxu0 0.0
    %1394 = vmatpush1.msra.mxu0 0.0
    %1395 = vmatprep.subr.mxu0 0.0
    %1396 = vmatpush1.msra.mxu0 0.0
    %1397 = vmatprep.subr.mxu0 0.0
    %1398 = vmatpush1.msra.mxu0 0.0
    %1399 = vmatprep.subr.mxu0 0.0
    %1400 = vmatpush1.msra.mxu0 0.0
    %1401 = vmatprep.subr.mxu0 0.0
    %1402 = vmatpush1.msra.mxu0 0.0
    %1403 = vmatprep.subr.mxu0 0.0
    %1404 = vmatpush1.msra.mxu0 0.0
    %1405 = vmatprep.subr.mxu0 0.0
    %1406 = vmatpush1.msra.mxu0 0.0
    %1407 = vmatprep.subr.mxu0 0.0
    %1408 = vmatpush1.msra.mxu0 0.0
    %1409 = vmatprep.subr.mxu0 0.0
    %1410 = vmatpush1.msra.mxu0 0.0
    %1411 = vmatprep.subr.mxu0 0.0
    %1412 = vmatpush1.msra.mxu0 0.0
    %1413 = vmatprep.subr.mxu0 0.0
    %1414 = vmatpush1.msra.mxu0 0.0
    %1415 = vmatprep.subr.mxu0 0.0
    %1416 = vmatpush1.msra.mxu0 %v1380
    %1417 = vmatprep.subr.mxu0 0.0
    %1418 = vmatpush2.msra.mxu0 0.0
    %1419 = vmatprep.subr.mxu0 0.0
    %1420 = vmatpush2.msra.mxu0 0.0
    %1421 = vmatprep.subr.mxu0 0.0
    %1422 = vmatpush2.msra.mxu0 0.0
    %1423 = vmatprep.subr.mxu0 0.0
    %1424 = vmatpush2.msra.mxu0 0.0
    %1425 = vmatprep.subr.mxu0 0.0
    %1426 = vmatpush2.msra.mxu0 0.0
    %1427 = vmatprep.subr.mxu0 0.0
    %1428 = vmatpush2.msra.mxu0 0.0
    %1429 = vmatprep.subr.mxu0 0.0
    %1430 = vmatpush2.msra.mxu0 0.0
    %1431 = vmatprep.subr.mxu0 0.0
    %1432 = vmatpush2.msra.mxu0 0.0
    %1433 = vmatprep.subr.mxu0 0.0
    %1434 = vmatpush2.msra.mxu0 0.0
    %1435 = vmatprep.subr.mxu0 0.0
    %1436 = vmatpush2.msra.mxu0 0.0
    %1437 = vmatprep.subr.mxu0 0.0
    %1438 = vmatpush2.msra.mxu0 0.0
    %1439 = vmatprep.subr.mxu0 0.0
    %1440 = vmatpush2.msra.mxu0 0.0
    %1441 = vmatprep.subr.mxu0 0.0
    %1442 = vmatpush2.msra.mxu0 0.0
    %1443 = vmatprep.subr.mxu0 0.0
    %1444 = vmatpush2.msra.mxu0 0.0
    %1445 = vmatprep.subr.mxu0 0.0
    %1446 = vmatpush2.msra.mxu0 0.0
    %1447 = vmatprep.subr.mxu0 0.0
    %1448 = vmatpush2.msra.mxu0 0.0
    %1449 = vmatprep.mubr.f32.mxu0 0.0
    %1450 = vmatmul.mubr.f32.gmra.mxu0 %v1383
    %v1451 = vpop.f32.mrf.mxu0
    %v1452 = vadd.f32 0.0, %v1451
    %v1453 = vpop.f32.mrf.mxu0
    %1454 = vdwg.mxu0
    %1455 = vrot.lane.b32.xlu0 %v202, 64
    %v1456 = vpop.permute.xlu0 %1455
    %v1459 = vsel %vm205, %v922, 0
    %1461 = vmatprep.subr.mxu0 0.0
    %1462 = vmatpush1.msra.mxu0 0.0
    %1463 = vmatprep.subr.mxu0 0.0
    %1464 = vmatpush1.msra.mxu0 0.0
    %1465 = vmatprep.subr.mxu0 0.0
    %1466 = vmatpush1.msra.mxu0 0.0
    %1467 = vmatprep.subr.mxu0 0.0
    %1468 = vmatpush1.msra.mxu0 0.0
    %1469 = vmatprep.subr.mxu0 0.0
    %1470 = vmatpush1.msra.mxu0 0.0
    %1471 = vmatprep.subr.mxu0 0.0
    %1472 = vmatpush1.msra.mxu0 0.0
    %1473 = vmatprep.subr.mxu0 0.0
    %1474 = vmatpush1.msra.mxu0 0.0
    %1475 = vmatprep.subr.mxu0 0.0
    %1476 = vmatpush1.msra.mxu0 0.0
    %1477 = vmatprep.subr.mxu0 0.0
    %1478 = vmatpush1.msra.mxu0 0.0
    %1479 = vmatprep.subr.mxu0 0.0
    %1480 = vmatpush1.msra.mxu0 0.0
    %1481 = vmatprep.subr.mxu0 0.0
    %1482 = vmatpush1.msra.mxu0 0.0
    %1483 = vmatprep.subr.mxu0 0.0
    %1484 = vmatpush1.msra.mxu0 0.0
    %1485 = vmatprep.subr.mxu0 0.0
    %1486 = vmatpush1.msra.mxu0 0.0
    %1487 = vmatprep.subr.mxu0 0.0
    %1488 = vmatpush1.msra.mxu0 0.0
    %1489 = vmatprep.subr.mxu0 0.0
    %1490 = vmatpush1.msra.mxu0 0.0
    %1491 = vmatprep.subr.mxu0 0.0
    %1492 = vmatpush1.msra.mxu0 %v1456
    %1493 = vmatprep.subr.mxu0 0.0
    %1494 = vmatpush2.msra.mxu0 0.0
    %1495 = vmatprep.subr.mxu0 0.0
    %1496 = vmatpush2.msra.mxu0 0.0
    %1497 = vmatprep.subr.mxu0 0.0
    %1498 = vmatpush2.msra.mxu0 0.0
    %1499 = vmatprep.subr.mxu0 0.0
    %1500 = vmatpush2.msra.mxu0 0.0
    %1501 = vmatprep.subr.mxu0 0.0
    %1502 = vmatpush2.msra.mxu0 0.0
    %1503 = vmatprep.subr.mxu0 0.0
    %1504 = vmatpush2.msra.mxu0 0.0
    %1505 = vmatprep.subr.mxu0 0.0
    %1506 = vmatpush2.msra.mxu0 0.0
    %1507 = vmatprep.subr.mxu0 0.0
    %1508 = vmatpush2.msra.mxu0 0.0
    %1509 = vmatprep.subr.mxu0 0.0
    %1510 = vmatpush2.msra.mxu0 0.0
    %1511 = vmatprep.subr.mxu0 0.0
    %1512 = vmatpush2.msra.mxu0 0.0
    %1513 = vmatprep.subr.mxu0 0.0
    %1514 = vmatpush2.msra.mxu0 0.0
    %1515 = vmatprep.subr.mxu0 0.0
    %1516 = vmatpush2.msra.mxu0 0.0
    %1517 = vmatprep.subr.mxu0 0.0
    %1518 = vmatpush2.msra.mxu0 0.0
    %1519 = vmatprep.subr.mxu0 0.0
    %1520 = vmatpush2.msra.mxu0 0.0
    %1521 = vmatprep.subr.mxu0 0.0
    %1522 = vmatpush2.msra.mxu0 0.0
    %1523 = vmatprep.subr.mxu0 0.0
    %1524 = vmatpush2.msra.mxu0 0.0
    %1525 = vmatprep.mubr.f32.mxu0 0.0
    %1526 = vmatmul.mubr.f32.gmra.mxu0 %v1459
    %v1527 = vpop.f32.mrf.mxu0
    %v1528 = vadd.f32 0.0, %v1527
    %v1529 = vpop.f32.mrf.mxu0
    %1530 = vdwg.mxu0
    %1533 = vrot.lane.b32.xlu0 %v1148, 8
    %v1534 = vpop.permute.xlu0 %1533
    %1535 = vrot.lane.b32.xlu0 %v1224, 8
    %v1536 = vpop.permute.xlu0 %1535
    %1541 = vrot.lane.b32.xlu0 %v1300, 16
    %v1542 = vpop.permute.xlu0 %1541
    %1543 = vrot.lane.b32.xlu0 %v1376, 16
    %v1544 = vpop.permute.xlu0 %1543
    %1549 = vrot.lane.b32.xlu0 %v1452, 24
    %v1550 = vpop.permute.xlu0 %1549
    %1551 = vrot.lane.b32.xlu0 %v1528, 24
    %v1552 = vpop.permute.xlu0 %1551
    %v1555 = vsel %vm205, %v996, %v1534
    %v1556 = vsel %vm205, %v1072, %v1536
    %vm1557 = vcmask 130048
    %v1558 = vsel %vm1557, %v1555, %v1542
    %v1559 = vsel %vm1557, %v1556, %v1544
    %vm1560 = vcmask 195584
    %v1561 = vsel %vm1560, %v1558, %v1550
    %v1562 = vsel %vm1560, %v1559, %v1552
    %v1563 = vld [vmem:[%s3] sm:$0xff]
    %v1564 = vld [vmem:[%s3 + $0x8] sm:$0xff]
    %v1565 = vld [vmem:[%s3 + $0x10] sm:$0xff]
    %v1566 = vld [vmem:[%s3 + $0x18] sm:$0xff]
    %v1567 = vld [vmem:[%s4] sm:$0x1]
    %v1569 = vlaneseq
    %v1570 = vshrl.u32 %v1569, 7
    %v1571 = vsub.s32 0, %v1570
    %v1572 = vrot.slane %v1567, %v1571
    %v1575 = vsel %vm49, %v1561, 0
    %v1578 = vsel %vm49, %v1562, 0
    %1580 = vmatprep.subr.mxu0 0.0
    %1581 = vmatpush1.msra.mxu0 0.0
    %1582 = vmatprep.subr.mxu0 0.0
    %1583 = vmatpush1.msra.mxu0 0.0
    %1584 = vmatprep.subr.mxu0 0.0
    %1585 = vmatpush1.msra.mxu0 0.0
    %1586 = vmatprep.subr.mxu0 0.0
    %1587 = vmatpush1.msra.mxu0 0.0
    %1588 = vmatprep.subr.mxu0 0.0
    %1589 = vmatpush1.msra.mxu0 0.0
    %1590 = vmatprep.subr.mxu0 0.0
    %1591 = vmatpush1.msra.mxu0 0.0
    %1592 = vmatprep.subr.mxu0 0.0
    %1593 = vmatpush1.msra.mxu0 0.0
    %1594 = vmatprep.subr.mxu0 0.0
    %1595 = vmatpush1.msra.mxu0 0.0
    %1596 = vmatprep.subr.mxu0 0.0
    %1597 = vmatpush1.msra.mxu0 0.0
    %1598 = vmatprep.subr.mxu0 0.0
    %1599 = vmatpush1.msra.mxu0 0.0
    %1600 = vmatprep.subr.mxu0 0.0
    %1601 = vmatpush1.msra.mxu0 0.0
    %1602 = vmatprep.subr.mxu0 0.0
    %1603 = vmatpush1.msra.mxu0 0.0
    %1604 = vmatprep.subr.mxu0 0.0
    %1605 = vmatpush1.msra.mxu0 %v1566
    %1606 = vmatprep.subr.mxu0 0.0
    %1607 = vmatpush1.msra.mxu0 %v1565
    %1608 = vmatprep.subr.mxu0 0.0
    %1609 = vmatpush1.msra.mxu0 %v1564
    %1610 = vmatprep.subr.mxu0 0.0
    %1611 = vmatpush1.msra.mxu0 %v1563
    %1612 = vmatprep.subr.mxu0 0.0
    %1613 = vmatpush2.msra.mxu0 0.0
    %1614 = vmatprep.subr.mxu0 0.0
    %1615 = vmatpush2.msra.mxu0 0.0
    %1616 = vmatprep.subr.mxu0 0.0
    %1617 = vmatpush2.msra.mxu0 0.0
    %1618 = vmatprep.subr.mxu0 0.0
    %1619 = vmatpush2.msra.mxu0 0.0
    %1620 = vmatprep.subr.mxu0 0.0
    %1621 = vmatpush2.msra.mxu0 0.0
    %1622 = vmatprep.subr.mxu0 0.0
    %1623 = vmatpush2.msra.mxu0 0.0
    %1624 = vmatprep.subr.mxu0 0.0
    %1625 = vmatpush2.msra.mxu0 0.0
    %1626 = vmatprep.subr.mxu0 0.0
    %1627 = vmatpush2.msra.mxu0 0.0
    %1628 = vmatprep.subr.mxu0 0.0
    %1629 = vmatpush2.msra.mxu0 0.0
    %1630 = vmatprep.subr.mxu0 0.0
    %1631 = vmatpush2.msra.mxu0 0.0
    %1632 = vmatprep.subr.mxu0 0.0
    %1633 = vmatpush2.msra.mxu0 0.0
    %1634 = vmatprep.subr.mxu0 0.0
    %1635 = vmatpush2.msra.mxu0 0.0
    %1636 = vmatprep.subr.mxu0 0.0
    %1637 = vmatpush2.msra.mxu0 0.0
    %1638 = vmatprep.subr.mxu0 0.0
    %1639 = vmatpush2.msra.mxu0 0.0
    %1640 = vmatprep.subr.mxu0 0.0
    %1641 = vmatpush2.msra.mxu0 0.0
    %1642 = vmatprep.subr.mxu0 0.0
    %1643 = vmatpush2.msra.mxu0 0.0
    %1644 = vmatprep.mubr.f32.mxu0 0.0
    %1645 = vmatmul.mubr.f32.gmra.mxu0 %v1575
    %v1646 = vpop.f32.mrf.mxu0
    %v1647 = vadd.f32 %v1572, %v1646
    %v1648 = vpop.f32.mrf.mxu0
    %1649 = vmatprep.mubr.f32.mxu0 0.0
    %1650 = vmatmul.mubr.f32.gmra.mxu0 %v1578
    %v1651 = vpop.f32.mrf.mxu0
    %v1652 = vadd.f32 %v1572, %v1651
    %v1653 = vpop.f32.mrf.mxu0
    %1654 = vdwg.mxu0
    %v1655 = vadd.f32 %v1647, %v45
    %v1656 = vadd.f32 %v1652, %v46
    %v1657 = vld [vmem:[%s7] sm:$0x1]
    %v1658 = vld [vmem:[%s8] sm:$0x1]
    %v1659 = vsel %vm49, %v1655, 0.0
    %1660 = vadd.xlane.f32.xlu0 %v1659
    %v1661 = vpop.xlane.xlu0 %1660
    %v1662 = vsel %vm49, %v1656, 0.0
    %1663 = vadd.xlane.f32.xlu0 %v1662
    %v1664 = vpop.xlane.xlu0 %1663
    %v1665 = vmul.f32 %v1661, %v56
    %v1666 = vmul.f32 %v1664, %v56
    %v1667 = vmul.f32 %v1655, %v1655
    %v1668 = vmul.f32 %v1656, %v1656
    %v1669 = vsel %vm49, %v1667, 0.0
    %1670 = vadd.xlane.f32.xlu0 %v1669
    %v1671 = vpop.xlane.xlu0 %1670
    %v1672 = vsel %vm49, %v1668, 0.0
    %1673 = vadd.xlane.f32.xlu0 %v1672
    %v1674 = vpop.xlane.xlu0 %1673
    %v1675 = vmul.f32 %v1671, %v56
    %v1676 = vmul.f32 %v1674, %v56
    %v1677 = vmul.f32 %v1665, %v1665
    %v1678 = vmul.f32 %v1666, %v1666
    %v1679 = vsub.f32 %v1675, %v1677
    %v1680 = vsub.f32 %v1676, %v1678
    %v1681 = vsub.f32 %v1655, %v1665
    %v1682 = vsub.f32 %v1656, %v1666
    %v1683 = vadd.f32 %v1679, 1e-05
    %v1684 = vadd.f32 %v1680, 1e-05
    %v1685 = vrsqrt.pop %v1683
    %v1686 = vrsqrt.pop %v1684
    %v1687 = vmul.f32 %v1681, %v1685
    %v1688 = vmul.f32 %v1682, %v1686
    %v1690 = vlaneseq
    %v1691 = vshrl.u32 %v1690, 7
    %v1692 = vsub.s32 0, %v1691
    %v1693 = vrot.slane %v1657, %v1692
    %v1695 = vmul.f32 %v1687, %v1693
    %v1696 = vmul.f32 %v1688, %v1693
    %v1698 = vlaneseq
    %v1699 = vshrl.u32 %v1698, 7
    %v1700 = vsub.s32 0, %v1699
    %v1701 = vrot.slane %v1658, %v1700
    %v1703 = vadd.f32 %v1695, %v1701
    %v1704 = vadd.f32 %v1696, %v1701
    %v1705 = vld [vmem:[%s9] sm:$0xff]
    %v1706 = vld [vmem:[%s9 + $0x8] sm:$0xff]
    %v1707 = vld [vmem:[%s9 + $0x10] sm:$0xff]
    %v1708 = vld [vmem:[%s9 + $0x18] sm:$0xff]
    %v1709 = vld [vmem:[%s10] sm:$0x1]
    %v1711 = vlaneseq
    %v1712 = vshrl.u32 %v1711, 7
    %v1713 = vsub.s32 0, %v1712
    %v1714 = vrot.slane %v1709, %v1713
    %v1717 = vsel %vm49, %v1703, 0
    %v1720 = vsel %vm49, %v1704, 0
    %1722 = vmatprep.subr.mxu0 0.0
    %1723 = vmatpush1.msra.mxu0 0.0
    %1724 = vmatprep.subr.mxu0 0.0
    %1725 = vmatpush1.msra.mxu0 0.0
    %1726 = vmatprep.subr.mxu0 0.0
    %1727 = vmatpush1.msra.mxu0 0.0
    %1728 = vmatprep.subr.mxu0 0.0
    %1729 = vmatpush1.msra.mxu0 0.0
    %1730 = vmatprep.subr.mxu0 0.0
    %1731 = vmatpush1.msra.mxu0 0.0
    %1732 = vmatprep.subr.mxu0 0.0
    %1733 = vmatpush1.msra.mxu0 0.0
    %1734 = vmatprep.subr.mxu0 0.0
    %1735 = vmatpush1.msra.mxu0 0.0
    %1736 = vmatprep.subr.mxu0 0.0
    %1737 = vmatpush1.msra.mxu0 0.0
    %1738 = vmatprep.subr.mxu0 0.0
    %1739 = vmatpush1.msra.mxu0 0.0
    %1740 = vmatprep.subr.mxu0 0.0
    %1741 = vmatpush1.msra.mxu0 0.0
    %1742 = vmatprep.subr.mxu0 0.0
    %1743 = vmatpush1.msra.mxu0 0.0
    %1744 = vmatprep.subr.mxu0 0.0
    %1745 = vmatpush1.msra.mxu0 0.0
    %1746 = vmatprep.subr.mxu0 0.0
    %1747 = vmatpush1.msra.mxu0 %v1708
    %1748 = vmatprep.subr.mxu0 0.0
    %1749 = vmatpush1.msra.mxu0 %v1707
    %1750 = vmatprep.subr.mxu0 0.0
    %1751 = vmatpush1.msra.mxu0 %v1706
    %1752 = vmatprep.subr.mxu0 0.0
    %1753 = vmatpush1.msra.mxu0 %v1705
    %1754 = vmatprep.subr.mxu0 0.0
    %1755 = vmatpush2.msra.mxu0 0.0
    %1756 = vmatprep.subr.mxu0 0.0
    %1757 = vmatpush2.msra.mxu0 0.0
    %1758 = vmatprep.subr.mxu0 0.0
    %1759 = vmatpush2.msra.mxu0 0.0
    %1760 = vmatprep.subr.mxu0 0.0
    %1761 = vmatpush2.msra.mxu0 0.0
    %1762 = vmatprep.subr.mxu0 0.0
    %1763 = vmatpush2.msra.mxu0 0.0
    %1764 = vmatprep.subr.mxu0 0.0
    %1765 = vmatpush2.msra.mxu0 0.0
    %1766 = vmatprep.subr.mxu0 0.0
    %1767 = vmatpush2.msra.mxu0 0.0
    %1768 = vmatprep.subr.mxu0 0.0
    %1769 = vmatpush2.msra.mxu0 0.0
    %1770 = vmatprep.subr.mxu0 0.0
    %1771 = vmatpush2.msra.mxu0 0.0
    %1772 = vmatprep.subr.mxu0 0.0
    %1773 = vmatpush2.msra.mxu0 0.0
    %1774 = vmatprep.subr.mxu0 0.0
    %1775 = vmatpush2.msra.mxu0 0.0
    %1776 = vmatprep.subr.mxu0 0.0
    %1777 = vmatpush2.msra.mxu0 0.0
    %1778 = vmatprep.subr.mxu0 0.0
    %1779 = vmatpush2.msra.mxu0 0.0
    %1780 = vmatprep.subr.mxu0 0.0
    %1781 = vmatpush2.msra.mxu0 0.0
    %1782 = vmatprep.subr.mxu0 0.0
    %1783 = vmatpush2.msra.mxu0 0.0
    %1784 = vmatprep.subr.mxu0 0.0
    %1785 = vmatpush2.msra.mxu0 0.0
    %1786 = vmatprep.mubr.f32.mxu0 0.0
    %1787 = vmatmul.mubr.f32.gmra.mxu0 %v1717
    %v1788 = vpop.f32.mrf.mxu0
    %v1789 = vadd.f32 %v1714, %v1788
    %v1790 = vpop.f32.mrf.mxu0
    %1791 = vmatprep.mubr.f32.mxu0 0.0
    %1792 = vmatmul.mubr.f32.gmra.mxu0 %v1720
    %v1793 = vpop.f32.mrf.mxu0
    %v1794 = vadd.f32 %v1714, %v1793
    %v1795 = vpop.f32.mrf.mxu0
    %1796 = vdwg.mxu0
    %v1797 = vmul.f32 %v1789, 0.5
    %v1798 = vmul.f32 %v1794, 0.5
    %v1799 = vmul.f32 %v1789, %v1789
    %v1800 = vmul.f32 %v1794, %v1794
    %v1801 = vmul.f32 %v1789, %v1799
    %v1802 = vmul.f32 %v1794, %v1800
    %v1803 = vmul.f32 %v1801, 0.044715
    %v1804 = vmul.f32 %v1802, 0.044715
    %v1805 = vadd.f32 %v1789, %v1803
    %v1806 = vadd.f32 %v1794, %v1804
    %v1807 = vmul.f32 %v1805, 0.7978845
    %v1808 = vmul.f32 %v1806, 0.7978845
    %v1809 = vtanh.pop %v1807
    %v1810 = vtanh.pop %v1808
    %v1811 = vadd.f32 %v1809, 1.0
    %v1812 = vadd.f32 %v1810, 1.0
    %v1813 = vmul.f32 %v1797, %v1811
    %v1814 = vmul.f32 %v1798, %v1812
    %v1815 = vld [vmem:[%s11] sm:$0xff]
    %v1816 = vld [vmem:[%s11 + $0x8] sm:$0xff]
    %v1817 = vld [vmem:[%s11 + $0x10] sm:$0xff]
    %v1818 = vld [vmem:[%s11 + $0x18] sm:$0xff]
    %v1819 = vld [vmem:[%s11 + $0x20] sm:$0xff]
    %v1820 = vld [vmem:[%s11 + $0x28] sm:$0xff]
    %v1821 = vld [vmem:[%s11 + $0x30] sm:$0xff]
    %v1822 = vld [vmem:[%s11 + $0x38] sm:$0xff]
    %v1823 = vld [vmem:[%s11 + $0x40] sm:$0xff]
    %v1824 = vld [vmem:[%s11 + $0x48] sm:$0xff]
    %v1825 = vld [vmem:[%s11 + $0x50] sm:$0xff]
    %v1826 = vld [vmem:[%s11 + $0x58] sm:$0xff]
    %v1827 = vld [vmem:[%s11 + $0x60] sm:$0xff]
    %v1828 = vld [vmem:[%s11 + $0x68] sm:$0xff]
    %v1829 = vld [vmem:[%s11 + $0x70] sm:$0xff]
    %v1830 = vld [vmem:[%s11 + $0x78] sm:$0xff]
    %v1831 = vld [vmem:[%s12] sm:$0x1]
    %v1833 = vlaneseq
    %v1834 = vshrl.u32 %v1833, 7
    %v1835 = vsub.s32 0, %v1834
    %v1836 = vrot.slane %v1831, %v1835
    %1838 = vmatprep.subr.mxu0 0.0
    %1839 = vmatpush1.msra.mxu0 %v1830
    %1840 = vmatprep.subr.mxu0 0.0
    %1841 = vmatpush1.msra.mxu0 %v1829
    %1842 = vmatprep.subr.mxu0 0.0
    %1843 = vmatpush1.msra.mxu0 %v1828
    %1844 = vmatprep.subr.mxu0 0.0
    %1845 = vmatpush1.msra.mxu0 %v1827
    %1846 = vmatprep.subr.mxu0 0.0
    %1847 = vmatpush1.msra.mxu0 %v1826
    %1848 = vmatprep.subr.mxu0 0.0
    %1849 = vmatpush1.msra.mxu0 %v1825
    %1850 = vmatprep.subr.mxu0 0.0
    %1851 = vmatpush1.msra.mxu0 %v1824
    %1852 = vmatprep.subr.mxu0 0.0
    %1853 = vmatpush1.msra.mxu0 %v1823
    %1854 = vmatprep.subr.mxu0 0.0
    %1855 = vmatpush1.msra.mxu0 %v1822
    %1856 = vmatprep.subr.mxu0 0.0
    %1857 = vmatpush1.msra.mxu0 %v1821
    %1858 = vmatprep.subr.mxu0 0.0
    %1859 = vmatpush1.msra.mxu0 %v1820
    %1860 = vmatprep.subr.mxu0 0.0
    %1861 = vmatpush1.msra.mxu0 %v1819
    %1862 = vmatprep.subr.mxu0 0.0
    %1863 = vmatpush1.msra.mxu0 %v1818
    %1864 = vmatprep.subr.mxu0 0.0
    %1865 = vmatpush1.msra.mxu0 %v1817
    %1866 = vmatprep.subr.mxu0 0.0
    %1867 = vmatpush1.msra.mxu0 %v1816
    %1868 = vmatprep.subr.mxu0 0.0
    %1869 = vmatpush1.msra.mxu0 %v1815
    %1870 = vmatprep.subr.mxu0 0.0
    %1871 = vmatpush2.msra.mxu0 0.0
    %1872 = vmatprep.subr.mxu0 0.0
    %1873 = vmatpush2.msra.mxu0 0.0
    %1874 = vmatprep.subr.mxu0 0.0
    %1875 = vmatpush2.msra.mxu0 0.0
    %1876 = vmatprep.subr.mxu0 0.0
    %1877 = vmatpush2.msra.mxu0 0.0
    %1878 = vmatprep.subr.mxu0 0.0
    %1879 = vmatpush2.msra.mxu0 0.0
    %1880 = vmatprep.subr.mxu0 0.0
    %1881 = vmatpush2.msra.mxu0 0.0
    %1882 = vmatprep.subr.mxu0 0.0
    %1883 = vmatpush2.msra.mxu0 0.0
    %1884 = vmatprep.subr.mxu0 0.0
    %1885 = vmatpush2.msra.mxu0 0.0
    %1886 = vmatprep.subr.mxu0 0.0
    %1887 = vmatpush2.msra.mxu0 0.0
    %1888 = vmatprep.subr.mxu0 0.0
    %1889 = vmatpush2.msra.mxu0 0.0
    %1890 = vmatprep.subr.mxu0 0.0
    %1891 = vmatpush2.msra.mxu0 0.0
    %1892 = vmatprep.subr.mxu0 0.0
    %1893 = vmatpush2.msra.mxu0 0.0
    %1894 = vmatprep.subr.mxu0 0.0
    %1895 = vmatpush2.msra.mxu0 0.0
    %1896 = vmatprep.subr.mxu0 0.0
    %1897 = vmatpush2.msra.mxu0 0.0
    %1898 = vmatprep.subr.mxu0 0.0
    %1899 = vmatpush2.msra.mxu0 0.0
    %1900 = vmatprep.subr.mxu0 0.0
    %1901 = vmatpush2.msra.mxu0 0.0
    %1902 = vmatprep.mubr.f32.mxu0 0.0
    %1903 = vmatmul.mubr.f32.gmra.mxu0 %v1813
    %v1904 = vpop.f32.mrf.mxu0
    %v1905 = vadd.f32 %v1836, %v1904
    %v1906 = vpop.f32.mrf.mxu0
    %1907 = vmatprep.mubr.f32.mxu0 0.0
    %1908 = vmatmul.mubr.f32.gmra.mxu0 %v1814
    %v1909 = vpop.f32.mrf.mxu0
    %v1910 = vadd.f32 %v1836, %v1909
    %v1911 = vpop.f32.mrf.mxu0
    %1912 = vdwg.mxu0
    %v1913 = vadd.f32 %v1905, %v1655
    %v1914 = vadd.f32 %v1910, %v1656
    %1915 = vst.msk [vmem:[#allocation2] sm:$0xff] %vm49, %v1913
    %1916 = vst.msk [vmem:[#allocation2 + $0x8] sm:$0xff] %vm49, %v1914
    // Predicated region
    $region54: #{tpu_custom_call.1} parent=1 // pred_check
      _
    $region55: #{tpu_custom_call.1} parent=1 // pred_check_branch
      %1918 = sbr.rel (0) target = $region57
    $region56: #{tpu_custom_call.1} parent=1 // pred_region
      %s1920 = ssub.s32 256, 256
      %1921 = vsyncadd [#allocation3], %s1920
      %s1922 = sshll.u32 [#allocation2], 4
      %s1923 = int_to_ptr.vmem [resolvable:$true] %s1922
      %1928 = dma.vmem_to_hbm [thread:$0]  %s1923, 256, %s13, [#allocation3], 128, 128, 8
    $region57: #{tpu_custom_call.1} parent=1 // pred_fallthru
      _
    // Predicated region
    $region58: #{tpu_custom_call.1} parent=1 // pred_check
      _
    $region59: #{tpu_custom_call.1} parent=1 // pred_check_branch
      %1930 = sbr.rel (0) target = $region61
    $region60: #{tpu_custom_call.1} parent=1 // pred_region
      %1931 = dma.done [#allocation3], 256
    $region61: #{tpu_custom_call.1} parent=1 // pred_fallthru
      _
    %1932 = vsyncpa [#allocation3], 1

</llo_original>
